<compile_context>
chip_gen: v6e
topology: v6e:2x2x1
jax: 0.10.0
libtpu: 0.0.40
codegen_flags: <defaults>
</compile_context>

<pallas_src>
import functools

import jax
import jax.numpy as jnp
from jax.experimental import pallas as pl
from jax.experimental.pallas import tpu as pltpu


def _pick_tile(total, target):
    """Largest divisor of `total` that is <= target (static loop counts)."""
    if total <= target:
        return total
    for cand in range(target, 0, -1):
        if total % cand == 0:
            return cand
    return total


def _t5_block_kernel(
    # pipelined per-batch inputs
    h_ref, mask_ref,
    # grid-invariant inputs left in HBM (memory_space=pl.ANY)
    pb_hbm, ln1_hbm, wqkv_hbm, wo_hbm, ln2_hbm, wi_hbm, wff_hbm,
    # output
    out_ref,
    # single-buffered VMEM scratch (persists across the batch grid)
    pb_w, ln1_w, wqkv_w, wo_w, ln2_w, wi_w, wff_w, ctx_buf, load_sems,
    *, num_heads, head_dim, q_tile, ff_chunk, compute_dtype, eps=1e-6):

    # ---- one-time constant load: HBM -> single-buffered VMEM scratch ----
    # (batch grid axis is "arbitrary" => sequential, so b==0 runs first.)
    @pl.when(pl.program_id(0) == 0)
    def _load_constants():
        pairs = ((pb_hbm, pb_w), (ln1_hbm, ln1_w), (wqkv_hbm, wqkv_w),
                 (wo_hbm, wo_w), (ln2_hbm, ln2_w), (wi_hbm, wi_w),
                 (wff_hbm, wff_w))
        copies = [pltpu.make_async_copy(src, dst, load_sems.at[i])
                  for i, (src, dst) in enumerate(pairs)]
        for c in copies:   # overlap all constant DMAs
            c.start()
        for c in copies:
            c.wait()

    h = h_ref[0].astype(jnp.float32)          # [S, D]  f32 for norms / residuals
    mask = mask_ref[0].astype(jnp.float32)    # [1, S]  additive key mask
    S, D = h.shape
    inner = num_heads * head_dim

    # ---------- T5LayerSelfAttention ----------
    # T5 RMSNorm (no mean subtraction, no bias); stats in f32, operand in bf16.
    var1 = jnp.mean(h * h, axis=-1, keepdims=True)
    x = (h * jax.lax.rsqrt(var1 + eps) * ln1_w[...].astype(jnp.float32)
         ).astype(compute_dtype)                                        # [S, D]

    # Fused QKV projection: one long-contraction matmul (bf16 in, f32 acc).
    qkv = jnp.dot(x, wqkv_w[...],
                  preferred_element_type=jnp.float32).astype(compute_dtype)  # [S, 3*inner]

    # Hoisted mask broadcast (JAX does not CSE broadcast_in_dim inside loops).
    mask_b = jnp.broadcast_to(mask, (q_tile, S))                        # [TQ, S]

    # Per-head attention in the native [S, H*dh] layout (no reshape/transpose),
    # tiled over query rows so the live score tensor is [q_tile, S].
    # T5 does NOT scale scores by 1/sqrt(d_head).
    # TODO(synk): for very long S, add online-softmax KV tiling and stream
    # position_bias per [H, TQ, TK] tile instead of holding it whole in VMEM.
    n_qt = S // q_tile
    for hd in range(num_heads):
        c0 = hd * head_dim
        kh = qkv[:, inner + c0: inner + c0 + head_dim]                  # [S, dh]
        vh = qkv[:, 2 * inner + c0: 2 * inner + c0 + head_dim]          # [S, dh]
        for qt in range(n_qt):
            q0 = qt * q_tile
            qh = qkv[q0:q0 + q_tile, c0:c0 + head_dim]                  # [TQ, dh]
            scores = jax.lax.dot_general(                               # qh @ kh.T
                qh, kh, (((1,), (1,)), ((), ())),
                preferred_element_type=jnp.float32)                     # [TQ, S]
            scores = (scores
                      + pb_w[hd, pl.ds(q0, q_tile), :].astype(jnp.float32)
                      + mask_b)
            m = jnp.max(scores, axis=-1, keepdims=True)
            e = jnp.exp(scores - m)
            denom = jnp.sum(e, axis=-1, keepdims=True)
            # Normalize AFTER the PV matmul (small [TQ, dh] multiply + EUP recip).
            ctx_h = jnp.dot(e.astype(compute_dtype), vh,
                            preferred_element_type=jnp.float32)          # [TQ, dh]
            ctx_h = ctx_h * pl.reciprocal(denom, approx=True)
            ctx_buf[pl.ds(q0, q_tile), pl.ds(c0, head_dim)] = \
                ctx_h.astype(compute_dtype)

    # Output projection as one full-contraction dot (keeps MXU depth = inner).
    attn_out = jnp.dot(ctx_buf[...], wo_w[...],
                       preferred_element_type=jnp.float32)               # [S, D]
    h1 = h + attn_out                                                    # residual

    # ---------- T5LayerFF (tiled over d_ff) ----------
    var2 = jnp.mean(h1 * h1, axis=-1, keepdims=True)
    y = (h1 * jax.lax.rsqrt(var2 + eps) * ln2_w[...].astype(jnp.float32)
         ).astype(compute_dtype)                                         # [S, D]
    d_ff = wi_w.shape[1]
    acc = jnp.zeros((S, D), jnp.float32)
    for j in range(d_ff // ff_chunk):
        csl = pl.ds(j * ff_chunk, ff_chunk)
        a = jnp.maximum(
            jnp.dot(y, wi_w[:, csl], preferred_element_type=jnp.float32), 0.0)
        acc = acc + jnp.dot(a.astype(compute_dtype), wff_w[csl, :],
                            preferred_element_type=jnp.float32)
    out_ref[0] = (h1 + acc).astype(out_ref.dtype)                        # residual


def checkpoint_wrapper_forward(hidden_states, attention_mask, position_bias, params,
                               *, num_heads, head_dim,
                               compute_dtype=jnp.bfloat16,
                               q_tile_target=256, ff_chunk_target=512):
    """CheckpointWrapper.forward at eval time: pass-through to the wrapped T5
    encoder block.  Returns (hidden_states, position_bias)."""
    B, S, D = hidden_states.shape
    H = num_heads
    inner = H * head_dim
    d_ff = params["wi"].shape[1]

    q_tile = _pick_tile(S, q_tile_target)
    ff_chunk = _pick_tile(d_ff, ff_chunk_target)

    # bf16 copies of the matmul weights + position bias (halves DMA and VMEM);
    # Q/K/V weights are fused into one [D, 3*inner] tensor; RMSNorm scales stay
    # in f32 (tiny, and norm math is kept in f32).
    wqkv = jnp.concatenate([params["wq"], params["wk"], params["wv"]],
                           axis=1).astype(compute_dtype)                # [D, 3*inner]
    wo = params["wo"].astype(compute_dtype)
    wi = params["wi"].astype(compute_dtype)
    wff = params["wff"].astype(compute_dtype)
    ln1 = params["ln1"].astype(jnp.float32)
    ln2 = params["ln2"].astype(jnp.float32)
    pb_c = position_bias.astype(compute_dtype)

    kernel = functools.partial(
        _t5_block_kernel, num_heads=H, head_dim=head_dim,
        q_tile=q_tile, ff_chunk=ff_chunk, compute_dtype=compute_dtype)

    def hbm():
        return pl.BlockSpec(memory_space=pl.ANY)

    grid_spec = pltpu.PrefetchScalarGridSpec(
        num_scalar_prefetch=0,
        grid=(B,),
        in_specs=[
            pl.BlockSpec((1, S, D), lambda b: (b, 0, 0)),   # hidden_states
            pl.BlockSpec((1, 1, S), lambda b: (b, 0, 0)),   # attention_mask
            hbm(),   # position_bias (loaded once into scratch)
            hbm(),   # ln1
            hbm(),   # wqkv (fused)
            hbm(),   # wo
            hbm(),   # ln2
            hbm(),   # wi
            hbm(),   # wff
        ],
        out_specs=pl.BlockSpec((1, S, D), lambda b: (b, 0, 0)),
        scratch_shapes=[
            pltpu.VMEM((H, S, S), compute_dtype),        # position_bias
            pltpu.VMEM((1, D), jnp.float32),             # ln1
            pltpu.VMEM((D, 3 * inner), compute_dtype),   # wqkv
            pltpu.VMEM((inner, D), compute_dtype),       # wo
            pltpu.VMEM((1, D), jnp.float32),             # ln2
            pltpu.VMEM((D, d_ff), compute_dtype),        # wi
            pltpu.VMEM((d_ff, D), compute_dtype),        # wff
            pltpu.VMEM((S, inner), compute_dtype),       # ctx buffer
            pltpu.SemaphoreType.DMA((7,)),               # constant-load sems
        ],
    )

    itemsize = lambda a: a.size * a.dtype.itemsize
    flops = int(B * (2 * S * D * 3 * inner            # fused QKV projection
                     + 2 * H * S * S * head_dim * 2   # scores + PV
                     + 2 * S * inner * D              # output projection
                     + 2 * S * D * d_ff * 2))         # FFN
    cost = pl.CostEstimate(
        flops=flops,
        transcendentals=int(B * H * S * S),
        bytes_accessed=int(2 * itemsize(hidden_states) + itemsize(attention_mask)
                           + itemsize(pb_c) + itemsize(ln1) + itemsize(ln2)
                           + itemsize(wqkv) + itemsize(wo)
                           + itemsize(wi) + itemsize(wff)))

    hidden_out = pl.pallas_call(
        kernel,
        out_shape=jax.ShapeDtypeStruct((B, S, D), hidden_states.dtype),
        grid_spec=grid_spec,
        compiler_params=pltpu.CompilerParams(
            # "arbitrary": constants are DMA'd once at b == 0 into persistent
            # scratch, so the batch axis must run in order on a single core.
            # TODO(synk): for v7x (2 TCs) either add a per-core constant load or
            # switch weights to single-buffered BlockSpec residency and mark this
            # axis "parallel" to use both cores.
            dimension_semantics=("arbitrary",),
            vmem_limit_bytes=48 * 1024 * 1024),
        cost_estimate=cost,
    )(hidden_states, attention_mask, pb_c,
      ln1, wqkv, wo, ln2, wi, wff)

    # The wrapped T5 block passes position_bias through unchanged.
    return (hidden_out, position_bias)


def make_params(key, d_model, num_heads, head_dim, d_ff):
    inner = num_heads * head_dim
    ks = jax.random.split(key, 6)
    scale = 0.05
    bf16 = jnp.bfloat16
    return {
        "ln1": jnp.ones((1, d_model), jnp.float32),
        "wq": (scale * jax.random.normal(ks[0], (d_model, inner), jnp.float32)).astype(bf16),
        "wk": (scale * jax.random.normal(ks[1], (d_model, inner), jnp.float32)).astype(bf16),
        "wv": (scale * jax.random.normal(ks[2], (d_model, inner), jnp.float32)).astype(bf16),
        "wo": (scale * jax.random.normal(ks[3], (inner, d_model), jnp.float32)).astype(bf16),
        "ln2": jnp.ones((1, d_model), jnp.float32),
        "wi": (scale * jax.random.normal(ks[4], (d_model, d_ff), jnp.float32)).astype(bf16),
        "wff": (scale * jax.random.normal(ks[5], (d_ff, d_model), jnp.float32)).astype(bf16),
    }


def t5_block_reference(h, mask, pb, params, num_heads, head_dim, eps=1e-6):
    """Pure-JAX f32 reference of the wrapped T5 encoder block forward."""
    h = h.astype(jnp.float32)
    mask = mask.astype(jnp.float32)
    pb = pb.astype(jnp.float32)
    p = {k: v.astype(jnp.float32) for k, v in params.items()}
    B, S, D = h.shape

    var1 = jnp.mean(h * h, axis=-1, keepdims=True)
    x = h * jax.lax.rsqrt(var1 + eps) * p["ln1"]
    q = x @ p["wq"]
    k = x @ p["wk"]
    v = x @ p["wv"]
    q = q.reshape(B, S, num_heads, head_dim).transpose(0, 2, 1, 3)
    k = k.reshape(B, S, num_heads, head_dim).transpose(0, 2, 1, 3)
    v = v.reshape(B, S, num_heads, head_dim).transpose(0, 2, 1, 3)
    scores = jnp.einsum('bhqd,bhkd->bhqk', q, k) + pb[None] + mask[:, :, None, :]
    attn = jax.nn.softmax(scores, axis=-1)
    ctx = jnp.einsum('bhqk,bhkd->bhqd', attn, v)
    ctx = ctx.transpose(0, 2, 1, 3).reshape(B, S, num_heads * head_dim)
    h1 = h + ctx @ p["wo"]
    var2 = jnp.mean(h1 * h1, axis=-1, keepdims=True)
    y = h1 * jax.lax.rsqrt(var2 + eps) * p["ln2"]
    return h1 + jnp.maximum(y @ p["wi"], 0.0) @ p["wff"]


if __name__ == "__main__":
    B, S, D = 2, 8, 32
    H, DH, DFF = 4, 8, 64

    key = jax.random.PRNGKey(0)
    k_h, k_pb, k_p = jax.random.split(key, 3)

    hidden_states = jax.random.normal(k_h, (B, S, D), jnp.float32).astype(jnp.bfloat16)

    # keep-mask: first sequence full length, second has 2 padded tokens.
    keep = jnp.array([[1] * 8, [1] * 6 + [0] * 2], jnp.float32)            # [B, S]
    attention_mask = ((1.0 - keep) * -1e9)[:, None, :]                     # [B, 1, S]

    position_bias = 0.1 * jax.random.normal(k_pb, (H, S, S), jnp.float32)  # [H, S, S]

    params = make_params(k_p, D, H, DH, DFF)

    out_hidden, out_pb = checkpoint_wrapper_forward(
        hidden_states, attention_mask, position_bias, params,
        num_heads=H, head_dim=DH)
    jax.block_until_ready(out_hidden)
    jax.block_until_ready(out_pb)

    assert out_hidden.shape == (B, S, D)
    assert out_hidden.dtype == hidden_states.dtype        # pass-through dtype
    assert out_pb.shape == (H, S, S)

    ref = t5_block_reference(hidden_states, attention_mask, position_bias,
                             params, H, DH)
    assert jnp.allclose(out_hidden.astype(jnp.float32), ref,
                        rtol=8e-2, atol=8e-2), "kernel/reference mismatch"

    print("KERNEL_OK")
</pallas_src>

<mosaic_0001>
module attributes {stable_mosaic.version = 11 : i64} {
  func.func @_t5_block_kernel(%arg0: i32, %arg1: memref<1x8x32xbf16, #tpu.memory_space<vmem>>, %arg2: memref<1x1x8xf32, #tpu.memory_space<vmem>>, %arg3: memref<4x8x8xbf16, #tpu.memory_space<any>>, %arg4: memref<1x32xf32, #tpu.memory_space<any>>, %arg5: memref<32x96xbf16, #tpu.memory_space<any>>, %arg6: memref<32x32xbf16, #tpu.memory_space<any>>, %arg7: memref<1x32xf32, #tpu.memory_space<any>>, %arg8: memref<32x64xbf16, #tpu.memory_space<any>>, %arg9: memref<64x32xbf16, #tpu.memory_space<any>>, %arg10: memref<1x8x32xbf16, #tpu.memory_space<vmem>>, %arg11: memref<4x8x8xbf16, #tpu.memory_space<vmem>>, %arg12: memref<1x32xf32, #tpu.memory_space<vmem>>, %arg13: memref<32x96xbf16, #tpu.memory_space<vmem>>, %arg14: memref<32x32xbf16, #tpu.memory_space<vmem>>, %arg15: memref<1x32xf32, #tpu.memory_space<vmem>>, %arg16: memref<32x64xbf16, #tpu.memory_space<vmem>>, %arg17: memref<64x32xbf16, #tpu.memory_space<vmem>>, %arg18: memref<8x32xbf16, #tpu.memory_space<vmem>>, %arg19: memref<7x!tpu.dma_semaphore, #tpu.memory_space<semaphore_mem>>) attributes {dimension_semantics = [#tpu.dimension_semantics<arbitrary>], iteration_bounds = array<i64: 2>, scalar_prefetch = 0 : i64, scratch_operands = 9 : i64, tpu.core_type = #tpu.core_type<tc>, window_params = [{transform_indices = @transform_0, window_bounds = array<i64: 1, 8, 32>}, {transform_indices = @transform_1, window_bounds = array<i64: 1, 1, 8>}, {}, {}, {}, {}, {}, {}, {}, {transform_indices = @transform_9, window_bounds = array<i64: 1, 8, 32>}]} {
    %c0_i32 = arith.constant 0 : i32
    %0 = arith.cmpi eq, %arg0, %c0_i32 : i32
    %1 = arith.extui %0 : i1 to i32
    %c0_i32_0 = arith.constant 0 : i32
    %2 = arith.cmpi ne, %1, %c0_i32_0 : i32
    scf.if %2 {
      %c0_i32_64 = arith.constant 0 : i32
      %151 = tpu.memref_slice %arg19[%c0_i32_64] : memref<7x!tpu.dma_semaphore, #tpu.memory_space<semaphore_mem>> -> memref<1x!tpu.dma_semaphore, #tpu.memory_space<semaphore_mem>>
      %152 = tpu.memref_squeeze %151 : memref<1x!tpu.dma_semaphore, #tpu.memory_space<semaphore_mem>> -> memref<!tpu.dma_semaphore, #tpu.memory_space<semaphore_mem>>
      tpu.enqueue_dma source(%arg3 : memref<4x8x8xbf16, #tpu.memory_space<any>>) target(%arg11 : memref<4x8x8xbf16, #tpu.memory_space<vmem>>) target_semaphore(%152 : memref<!tpu.dma_semaphore, #tpu.memory_space<semaphore_mem>>)
      %c1_i32 = arith.constant 1 : i32
      %153 = tpu.memref_slice %arg19[%c1_i32] : memref<7x!tpu.dma_semaphore, #tpu.memory_space<semaphore_mem>> -> memref<1x!tpu.dma_semaphore, #tpu.memory_space<semaphore_mem>>
      %154 = tpu.memref_squeeze %153 : memref<1x!tpu.dma_semaphore, #tpu.memory_space<semaphore_mem>> -> memref<!tpu.dma_semaphore, #tpu.memory_space<semaphore_mem>>
      tpu.enqueue_dma source(%arg4 : memref<1x32xf32, #tpu.memory_space<any>>) target(%arg12 : memref<1x32xf32, #tpu.memory_space<vmem>>) target_semaphore(%154 : memref<!tpu.dma_semaphore, #tpu.memory_space<semaphore_mem>>)
      %c2_i32 = arith.constant 2 : i32
      %155 = tpu.memref_slice %arg19[%c2_i32] : memref<7x!tpu.dma_semaphore, #tpu.memory_space<semaphore_mem>> -> memref<1x!tpu.dma_semaphore, #tpu.memory_space<semaphore_mem>>
      %156 = tpu.memref_squeeze %155 : memref<1x!tpu.dma_semaphore, #tpu.memory_space<semaphore_mem>> -> memref<!tpu.dma_semaphore, #tpu.memory_space<semaphore_mem>>
      tpu.enqueue_dma source(%arg5 : memref<32x96xbf16, #tpu.memory_space<any>>) target(%arg13 : memref<32x96xbf16, #tpu.memory_space<vmem>>) target_semaphore(%156 : memref<!tpu.dma_semaphore, #tpu.memory_space<semaphore_mem>>)
      %c3_i32 = arith.constant 3 : i32
      %157 = tpu.memref_slice %arg19[%c3_i32] : memref<7x!tpu.dma_semaphore, #tpu.memory_space<semaphore_mem>> -> memref<1x!tpu.dma_semaphore, #tpu.memory_space<semaphore_mem>>
      %158 = tpu.memref_squeeze %157 : memref<1x!tpu.dma_semaphore, #tpu.memory_space<semaphore_mem>> -> memref<!tpu.dma_semaphore, #tpu.memory_space<semaphore_mem>>
      tpu.enqueue_dma source(%arg6 : memref<32x32xbf16, #tpu.memory_space<any>>) target(%arg14 : memref<32x32xbf16, #tpu.memory_space<vmem>>) target_semaphore(%158 : memref<!tpu.dma_semaphore, #tpu.memory_space<semaphore_mem>>)
      %c4_i32 = arith.constant 4 : i32
      %159 = tpu.memref_slice %arg19[%c4_i32] : memref<7x!tpu.dma_semaphore, #tpu.memory_space<semaphore_mem>> -> memref<1x!tpu.dma_semaphore, #tpu.memory_space<semaphore_mem>>
      %160 = tpu.memref_squeeze %159 : memref<1x!tpu.dma_semaphore, #tpu.memory_space<semaphore_mem>> -> memref<!tpu.dma_semaphore, #tpu.memory_space<semaphore_mem>>
      tpu.enqueue_dma source(%arg7 : memref<1x32xf32, #tpu.memory_space<any>>) target(%arg15 : memref<1x32xf32, #tpu.memory_space<vmem>>) target_semaphore(%160 : memref<!tpu.dma_semaphore, #tpu.memory_space<semaphore_mem>>)
      %c5_i32 = arith.constant 5 : i32
      %161 = tpu.memref_slice %arg19[%c5_i32] : memref<7x!tpu.dma_semaphore, #tpu.memory_space<semaphore_mem>> -> memref<1x!tpu.dma_semaphore, #tpu.memory_space<semaphore_mem>>
      %162 = tpu.memref_squeeze %161 : memref<1x!tpu.dma_semaphore, #tpu.memory_space<semaphore_mem>> -> memref<!tpu.dma_semaphore, #tpu.memory_space<semaphore_mem>>
      tpu.enqueue_dma source(%arg8 : memref<32x64xbf16, #tpu.memory_space<any>>) target(%arg16 : memref<32x64xbf16, #tpu.memory_space<vmem>>) target_semaphore(%162 : memref<!tpu.dma_semaphore, #tpu.memory_space<semaphore_mem>>)
      %c6_i32 = arith.constant 6 : i32
      %163 = tpu.memref_slice %arg19[%c6_i32] : memref<7x!tpu.dma_semaphore, #tpu.memory_space<semaphore_mem>> -> memref<1x!tpu.dma_semaphore, #tpu.memory_space<semaphore_mem>>
      %164 = tpu.memref_squeeze %163 : memref<1x!tpu.dma_semaphore, #tpu.memory_space<semaphore_mem>> -> memref<!tpu.dma_semaphore, #tpu.memory_space<semaphore_mem>>
      tpu.enqueue_dma source(%arg9 : memref<64x32xbf16, #tpu.memory_space<any>>) target(%arg17 : memref<64x32xbf16, #tpu.memory_space<vmem>>) target_semaphore(%164 : memref<!tpu.dma_semaphore, #tpu.memory_space<semaphore_mem>>)
      %c0_i32_65 = arith.constant 0 : i32
      %165 = tpu.memref_slice %arg19[%c0_i32_65] : memref<7x!tpu.dma_semaphore, #tpu.memory_space<semaphore_mem>> -> memref<1x!tpu.dma_semaphore, #tpu.memory_space<semaphore_mem>>
      %166 = tpu.memref_squeeze %165 : memref<1x!tpu.dma_semaphore, #tpu.memory_space<semaphore_mem>> -> memref<!tpu.dma_semaphore, #tpu.memory_space<semaphore_mem>>
      tpu.wait_dma2 semaphore(%166 : memref<!tpu.dma_semaphore, #tpu.memory_space<semaphore_mem>>) src(%arg3 : memref<4x8x8xbf16, #tpu.memory_space<any>>) dst(%arg11 : memref<4x8x8xbf16, #tpu.memory_space<vmem>>)
      %c1_i32_66 = arith.constant 1 : i32
      %167 = tpu.memref_slice %arg19[%c1_i32_66] : memref<7x!tpu.dma_semaphore, #tpu.memory_space<semaphore_mem>> -> memref<1x!tpu.dma_semaphore, #tpu.memory_space<semaphore_mem>>
      %168 = tpu.memref_squeeze %167 : memref<1x!tpu.dma_semaphore, #tpu.memory_space<semaphore_mem>> -> memref<!tpu.dma_semaphore, #tpu.memory_space<semaphore_mem>>
      tpu.wait_dma2 semaphore(%168 : memref<!tpu.dma_semaphore, #tpu.memory_space<semaphore_mem>>) src(%arg4 : memref<1x32xf32, #tpu.memory_space<any>>) dst(%arg12 : memref<1x32xf32, #tpu.memory_space<vmem>>)
      %c2_i32_67 = arith.constant 2 : i32
      %169 = tpu.memref_slice %arg19[%c2_i32_67] : memref<7x!tpu.dma_semaphore, #tpu.memory_space<semaphore_mem>> -> memref<1x!tpu.dma_semaphore, #tpu.memory_space<semaphore_mem>>
      %170 = tpu.memref_squeeze %169 : memref<1x!tpu.dma_semaphore, #tpu.memory_space<semaphore_mem>> -> memref<!tpu.dma_semaphore, #tpu.memory_space<semaphore_mem>>
      tpu.wait_dma2 semaphore(%170 : memref<!tpu.dma_semaphore, #tpu.memory_space<semaphore_mem>>) src(%arg5 : memref<32x96xbf16, #tpu.memory_space<any>>) dst(%arg13 : memref<32x96xbf16, #tpu.memory_space<vmem>>)
      %c3_i32_68 = arith.constant 3 : i32
      %171 = tpu.memref_slice %arg19[%c3_i32_68] : memref<7x!tpu.dma_semaphore, #tpu.memory_space<semaphore_mem>> -> memref<1x!tpu.dma_semaphore, #tpu.memory_space<semaphore_mem>>
      %172 = tpu.memref_squeeze %171 : memref<1x!tpu.dma_semaphore, #tpu.memory_space<semaphore_mem>> -> memref<!tpu.dma_semaphore, #tpu.memory_space<semaphore_mem>>
      tpu.wait_dma2 semaphore(%172 : memref<!tpu.dma_semaphore, #tpu.memory_space<semaphore_mem>>) src(%arg6 : memref<32x32xbf16, #tpu.memory_space<any>>) dst(%arg14 : memref<32x32xbf16, #tpu.memory_space<vmem>>)
      %c4_i32_69 = arith.constant 4 : i32
      %173 = tpu.memref_slice %arg19[%c4_i32_69] : memref<7x!tpu.dma_semaphore, #tpu.memory_space<semaphore_mem>> -> memref<1x!tpu.dma_semaphore, #tpu.memory_space<semaphore_mem>>
      %174 = tpu.memref_squeeze %173 : memref<1x!tpu.dma_semaphore, #tpu.memory_space<semaphore_mem>> -> memref<!tpu.dma_semaphore, #tpu.memory_space<semaphore_mem>>
      tpu.wait_dma2 semaphore(%174 : memref<!tpu.dma_semaphore, #tpu.memory_space<semaphore_mem>>) src(%arg7 : memref<1x32xf32, #tpu.memory_space<any>>) dst(%arg15 : memref<1x32xf32, #tpu.memory_space<vmem>>)
      %c5_i32_70 = arith.constant 5 : i32
      %175 = tpu.memref_slice %arg19[%c5_i32_70] : memref<7x!tpu.dma_semaphore, #tpu.memory_space<semaphore_mem>> -> memref<1x!tpu.dma_semaphore, #tpu.memory_space<semaphore_mem>>
      %176 = tpu.memref_squeeze %175 : memref<1x!tpu.dma_semaphore, #tpu.memory_space<semaphore_mem>> -> memref<!tpu.dma_semaphore, #tpu.memory_space<semaphore_mem>>
      tpu.wait_dma2 semaphore(%176 : memref<!tpu.dma_semaphore, #tpu.memory_space<semaphore_mem>>) src(%arg8 : memref<32x64xbf16, #tpu.memory_space<any>>) dst(%arg16 : memref<32x64xbf16, #tpu.memory_space<vmem>>)
      %c6_i32_71 = arith.constant 6 : i32
      %177 = tpu.memref_slice %arg19[%c6_i32_71] : memref<7x!tpu.dma_semaphore, #tpu.memory_space<semaphore_mem>> -> memref<1x!tpu.dma_semaphore, #tpu.memory_space<semaphore_mem>>
      %178 = tpu.memref_squeeze %177 : memref<1x!tpu.dma_semaphore, #tpu.memory_space<semaphore_mem>> -> memref<!tpu.dma_semaphore, #tpu.memory_space<semaphore_mem>>
      tpu.wait_dma2 semaphore(%178 : memref<!tpu.dma_semaphore, #tpu.memory_space<semaphore_mem>>) src(%arg9 : memref<64x32xbf16, #tpu.memory_space<any>>) dst(%arg17 : memref<64x32xbf16, #tpu.memory_space<vmem>>)
    } else {
    }
    %c0 = arith.constant 0 : index
    %c0_1 = arith.constant 0 : index
    %c0_2 = arith.constant 0 : index
    %3 = vector.load %arg1[%c0, %c0_1, %c0_2] : memref<1x8x32xbf16, #tpu.memory_space<vmem>>, vector<1x8x32xbf16>
    %4 = vector.shape_cast %3 : vector<1x8x32xbf16> to vector<8x32xbf16>
    %5 = arith.extf %4 : vector<8x32xbf16> to vector<8x32xf32>
    %c0_3 = arith.constant 0 : index
    %c0_4 = arith.constant 0 : index
    %c0_5 = arith.constant 0 : index
    %6 = vector.load %arg2[%c0_3, %c0_4, %c0_5] : memref<1x1x8xf32, #tpu.memory_space<vmem>>, vector<1x1x8xf32>
    %7 = vector.shape_cast %6 : vector<1x1x8xf32> to vector<1x8xf32>
    %8 = arith.mulf %5, %5 : vector<8x32xf32>
    %cst = arith.constant dense<0.000000e+00> : vector<8xf32>
    %9 = vector.multi_reduction <add>, %8, %cst [1] : vector<8x32xf32> to vector<8xf32>
    %10 = vector.shape_cast %9 : vector<8xf32> to vector<8x1xf32>
    %cst_6 = arith.constant 3.200000e+01 : f32
    %11 = vector.broadcast %cst_6 : f32 to vector<8x1xf32>
    %12 = arith.divf %10, %11 : vector<8x1xf32>
    %cst_7 = arith.constant 9.99999997E-7 : f32
    %13 = vector.broadcast %cst_7 : f32 to vector<8x1xf32>
    %14 = arith.addf %12, %13 : vector<8x1xf32>
    %15 = math.rsqrt %14 : vector<8x1xf32>
    %16 = vector.broadcast %15 : vector<8x1xf32> to vector<8x32xf32>
    %17 = arith.mulf %5, %16 : vector<8x32xf32>
    %c0_8 = arith.constant 0 : index
    %c0_9 = arith.constant 0 : index
    %18 = vector.load %arg12[%c0_8, %c0_9] : memref<1x32xf32, #tpu.memory_space<vmem>>, vector<1x32xf32>
    %19 = vector.broadcast %18 : vector<1x32xf32> to vector<8x32xf32>
    %20 = arith.mulf %17, %19 : vector<8x32xf32>
    %21 = arith.truncf %20 : vector<8x32xf32> to vector<8x32xbf16>
    %c0_10 = arith.constant 0 : index
    %c0_11 = arith.constant 0 : index
    %22 = vector.load %arg13[%c0_10, %c0_11] : memref<32x96xbf16, #tpu.memory_space<vmem>>, vector<32x96xbf16>
    %cst_12 = arith.constant dense<0.000000e+00> : vector<8x96xf32>
    %23 = tpu.matmul %21, %22, %cst_12 {dimension_numbers = #tpu.dot_dimension_numbers<[1], [0], [0], [1], [0, 0, 1, 1], [], []>} : vector<8x32xbf16>, vector<32x96xbf16>, vector<8x96xf32> -> vector<8x96xf32>
    %24 = arith.truncf %23 : vector<8x96xf32> to vector<8x96xbf16>
    %25 = vector.shape_cast %7 : vector<1x8xf32> to vector<1x8xf32>
    %26 = vector.broadcast %25 : vector<1x8xf32> to vector<8x8xf32>
    %27 = vector.extract_strided_slice %24 {offsets = [0, 32], sizes = [8, 8], strides = [1, 1]} : vector<8x96xbf16> to vector<8x8xbf16>
    %28 = vector.extract_strided_slice %24 {offsets = [0, 64], sizes = [8, 8], strides = [1, 1]} : vector<8x96xbf16> to vector<8x8xbf16>
    %29 = vector.extract_strided_slice %24 {offsets = [0, 0], sizes = [8, 8], strides = [1, 1]} : vector<8x96xbf16> to vector<8x8xbf16>
    %cst_13 = arith.constant dense<0.000000e+00> : vector<8x8xf32>
    %30 = tpu.matmul %29, %27, %cst_13 {dimension_numbers = #tpu.dot_dimension_numbers<[1], [1], [0], [0], [0, 0, 1, 0], [], []>} : vector<8x8xbf16>, vector<8x8xbf16>, vector<8x8xf32> -> vector<8x8xf32>
    %c0_14 = arith.constant 0 : index
    %c0_15 = arith.constant 0 : index
    %c0_16 = arith.constant 0 : index
    %31 = vector.load %arg11[%c0_14, %c0_15, %c0_16] : memref<4x8x8xbf16, #tpu.memory_space<vmem>>, vector<1x8x8xbf16>
    %32 = vector.shape_cast %31 : vector<1x8x8xbf16> to vector<8x8xbf16>
    %33 = arith.extf %32 : vector<8x8xbf16> to vector<8x8xf32>
    %34 = arith.addf %30, %33 : vector<8x8xf32>
    %35 = arith.addf %34, %26 : vector<8x8xf32>
    %cst_17 = arith.constant dense<0xFF800000> : vector<8xf32>
    %36 = vector.multi_reduction <maximumf>, %35, %cst_17 [1] : vector<8x8xf32> to vector<8xf32>
    %37 = vector.shape_cast %36 : vector<8xf32> to vector<8x1xf32>
    %38 = vector.broadcast %37 : vector<8x1xf32> to vector<8x8xf32>
    %39 = arith.subf %35, %38 : vector<8x8xf32>
    %40 = math.exp %39 : vector<8x8xf32>
    %cst_18 = arith.constant dense<0.000000e+00> : vector<8xf32>
    %41 = vector.multi_reduction <add>, %40, %cst_18 [1] : vector<8x8xf32> to vector<8xf32>
    %42 = vector.shape_cast %41 : vector<8xf32> to vector<8x1xf32>
    %43 = arith.truncf %40 : vector<8x8xf32> to vector<8x8xbf16>
    %cst_19 = arith.constant dense<0.000000e+00> : vector<8x8xf32>
    %44 = tpu.matmul %43, %28, %cst_19 {dimension_numbers = #tpu.dot_dimension_numbers<[1], [0], [0], [1], [0, 0, 1, 1], [], []>} : vector<8x8xbf16>, vector<8x8xbf16>, vector<8x8xf32> -> vector<8x8xf32>
    %45 = tpu.reciprocal %42 {approx = true} : vector<8x1xf32> -> vector<8x1xf32>
    %46 = vector.broadcast %45 : vector<8x1xf32> to vector<8x8xf32>
    %47 = arith.mulf %44, %46 : vector<8x8xf32>
    %48 = arith.truncf %47 : vector<8x8xf32> to vector<8x8xbf16>
    %c0_20 = arith.constant 0 : index
    %c0_21 = arith.constant 0 : index
    %49 = vector.load %arg18[%c0_20, %c0_21] : memref<8x32xbf16, #tpu.memory_space<vmem>>, vector<8x8xbf16>
    tpu.vector_store %arg18[%c0_20, %c0_21], %48 {strides = array<i32>} : memref<8x32xbf16, #tpu.memory_space<vmem>>, vector<8x8xbf16>,
    %50 = vector.extract_strided_slice %24 {offsets = [0, 40], sizes = [8, 8], strides = [1, 1]} : vector<8x96xbf16> to vector<8x8xbf16>
    %51 = vector.extract_strided_slice %24 {offsets = [0, 72], sizes = [8, 8], strides = [1, 1]} : vector<8x96xbf16> to vector<8x8xbf16>
    %52 = vector.extract_strided_slice %24 {offsets = [0, 8], sizes = [8, 8], strides = [1, 1]} : vector<8x96xbf16> to vector<8x8xbf16>
    %cst_22 = arith.constant dense<0.000000e+00> : vector<8x8xf32>
    %53 = tpu.matmul %52, %50, %cst_22 {dimension_numbers = #tpu.dot_dimension_numbers<[1], [1], [0], [0], [0, 0, 1, 0], [], []>} : vector<8x8xbf16>, vector<8x8xbf16>, vector<8x8xf32> -> vector<8x8xf32>
    %c1 = arith.constant 1 : index
    %c0_23 = arith.constant 0 : index
    %c0_24 = arith.constant 0 : index
    %54 = vector.load %arg11[%c1, %c0_23, %c0_24] : memref<4x8x8xbf16, #tpu.memory_space<vmem>>, vector<1x8x8xbf16>
    %55 = vector.shape_cast %54 : vector<1x8x8xbf16> to vector<8x8xbf16>
    %56 = arith.extf %55 : vector<8x8xbf16> to vector<8x8xf32>
    %57 = arith.addf %53, %56 : vector<8x8xf32>
    %58 = arith.addf %57, %26 : vector<8x8xf32>
    %cst_25 = arith.constant dense<0xFF800000> : vector<8xf32>
    %59 = vector.multi_reduction <maximumf>, %58, %cst_25 [1] : vector<8x8xf32> to vector<8xf32>
    %60 = vector.shape_cast %59 : vector<8xf32> to vector<8x1xf32>
    %61 = vector.broadcast %60 : vector<8x1xf32> to vector<8x8xf32>
    %62 = arith.subf %58, %61 : vector<8x8xf32>
    %63 = math.exp %62 : vector<8x8xf32>
    %cst_26 = arith.constant dense<0.000000e+00> : vector<8xf32>
    %64 = vector.multi_reduction <add>, %63, %cst_26 [1] : vector<8x8xf32> to vector<8xf32>
    %65 = vector.shape_cast %64 : vector<8xf32> to vector<8x1xf32>
    %66 = arith.truncf %63 : vector<8x8xf32> to vector<8x8xbf16>
    %cst_27 = arith.constant dense<0.000000e+00> : vector<8x8xf32>
    %67 = tpu.matmul %66, %51, %cst_27 {dimension_numbers = #tpu.dot_dimension_numbers<[1], [0], [0], [1], [0, 0, 1, 1], [], []>} : vector<8x8xbf16>, vector<8x8xbf16>, vector<8x8xf32> -> vector<8x8xf32>
    %68 = tpu.reciprocal %65 {approx = true} : vector<8x1xf32> -> vector<8x1xf32>
    %69 = vector.broadcast %68 : vector<8x1xf32> to vector<8x8xf32>
    %70 = arith.mulf %67, %69 : vector<8x8xf32>
    %71 = arith.truncf %70 : vector<8x8xf32> to vector<8x8xbf16>
    %c0_28 = arith.constant 0 : index
    %c8 = arith.constant 8 : index
    %72 = vector.load %arg18[%c0_28, %c8] : memref<8x32xbf16, #tpu.memory_space<vmem>>, vector<8x8xbf16>
    tpu.vector_store %arg18[%c0_28, %c8], %71 {strides = array<i32>} : memref<8x32xbf16, #tpu.memory_space<vmem>>, vector<8x8xbf16>,
    %73 = vector.extract_strided_slice %24 {offsets = [0, 48], sizes = [8, 8], strides = [1, 1]} : vector<8x96xbf16> to vector<8x8xbf16>
    %74 = vector.extract_strided_slice %24 {offsets = [0, 80], sizes = [8, 8], strides = [1, 1]} : vector<8x96xbf16> to vector<8x8xbf16>
    %75 = vector.extract_strided_slice %24 {offsets = [0, 16], sizes = [8, 8], strides = [1, 1]} : vector<8x96xbf16> to vector<8x8xbf16>
    %cst_29 = arith.constant dense<0.000000e+00> : vector<8x8xf32>
    %76 = tpu.matmul %75, %73, %cst_29 {dimension_numbers = #tpu.dot_dimension_numbers<[1], [1], [0], [0], [0, 0, 1, 0], [], []>} : vector<8x8xbf16>, vector<8x8xbf16>, vector<8x8xf32> -> vector<8x8xf32>
    %c2 = arith.constant 2 : index
    %c0_30 = arith.constant 0 : index
    %c0_31 = arith.constant 0 : index
    %77 = vector.load %arg11[%c2, %c0_30, %c0_31] : memref<4x8x8xbf16, #tpu.memory_space<vmem>>, vector<1x8x8xbf16>
    %78 = vector.shape_cast %77 : vector<1x8x8xbf16> to vector<8x8xbf16>
    %79 = arith.extf %78 : vector<8x8xbf16> to vector<8x8xf32>
    %80 = arith.addf %76, %79 : vector<8x8xf32>
    %81 = arith.addf %80, %26 : vector<8x8xf32>
    %cst_32 = arith.constant dense<0xFF800000> : vector<8xf32>
    %82 = vector.multi_reduction <maximumf>, %81, %cst_32 [1] : vector<8x8xf32> to vector<8xf32>
    %83 = vector.shape_cast %82 : vector<8xf32> to vector<8x1xf32>
    %84 = vector.broadcast %83 : vector<8x1xf32> to vector<8x8xf32>
    %85 = arith.subf %81, %84 : vector<8x8xf32>
    %86 = math.exp %85 : vector<8x8xf32>
    %cst_33 = arith.constant dense<0.000000e+00> : vector<8xf32>
    %87 = vector.multi_reduction <add>, %86, %cst_33 [1] : vector<8x8xf32> to vector<8xf32>
    %88 = vector.shape_cast %87 : vector<8xf32> to vector<8x1xf32>
    %89 = arith.truncf %86 : vector<8x8xf32> to vector<8x8xbf16>
    %cst_34 = arith.constant dense<0.000000e+00> : vector<8x8xf32>
    %90 = tpu.matmul %89, %74, %cst_34 {dimension_numbers = #tpu.dot_dimension_numbers<[1], [0], [0], [1], [0, 0, 1, 1], [], []>} : vector<8x8xbf16>, vector<8x8xbf16>, vector<8x8xf32> -> vector<8x8xf32>
    %91 = tpu.reciprocal %88 {approx = true} : vector<8x1xf32> -> vector<8x1xf32>
    %92 = vector.broadcast %91 : vector<8x1xf32> to vector<8x8xf32>
    %93 = arith.mulf %90, %92 : vector<8x8xf32>
    %94 = arith.truncf %93 : vector<8x8xf32> to vector<8x8xbf16>
    %c0_35 = arith.constant 0 : index
    %c16 = arith.constant 16 : index
    %95 = vector.load %arg18[%c0_35, %c16] : memref<8x32xbf16, #tpu.memory_space<vmem>>, vector<8x8xbf16>
    tpu.vector_store %arg18[%c0_35, %c16], %94 {strides = array<i32>} : memref<8x32xbf16, #tpu.memory_space<vmem>>, vector<8x8xbf16>,
    %96 = vector.extract_strided_slice %24 {offsets = [0, 56], sizes = [8, 8], strides = [1, 1]} : vector<8x96xbf16> to vector<8x8xbf16>
    %97 = vector.extract_strided_slice %24 {offsets = [0, 88], sizes = [8, 8], strides = [1, 1]} : vector<8x96xbf16> to vector<8x8xbf16>
    %98 = vector.extract_strided_slice %24 {offsets = [0, 24], sizes = [8, 8], strides = [1, 1]} : vector<8x96xbf16> to vector<8x8xbf16>
    %cst_36 = arith.constant dense<0.000000e+00> : vector<8x8xf32>
    %99 = tpu.matmul %98, %96, %cst_36 {dimension_numbers = #tpu.dot_dimension_numbers<[1], [1], [0], [0], [0, 0, 1, 0], [], []>} : vector<8x8xbf16>, vector<8x8xbf16>, vector<8x8xf32> -> vector<8x8xf32>
    %c3 = arith.constant 3 : index
    %c0_37 = arith.constant 0 : index
    %c0_38 = arith.constant 0 : index
    %100 = vector.load %arg11[%c3, %c0_37, %c0_38] : memref<4x8x8xbf16, #tpu.memory_space<vmem>>, vector<1x8x8xbf16>
    %101 = vector.shape_cast %100 : vector<1x8x8xbf16> to vector<8x8xbf16>
    %102 = arith.extf %101 : vector<8x8xbf16> to vector<8x8xf32>
    %103 = arith.addf %99, %102 : vector<8x8xf32>
    %104 = arith.addf %103, %26 : vector<8x8xf32>
    %cst_39 = arith.constant dense<0xFF800000> : vector<8xf32>
    %105 = vector.multi_reduction <maximumf>, %104, %cst_39 [1] : vector<8x8xf32> to vector<8xf32>
    %106 = vector.shape_cast %105 : vector<8xf32> to vector<8x1xf32>
    %107 = vector.broadcast %106 : vector<8x1xf32> to vector<8x8xf32>
    %108 = arith.subf %104, %107 : vector<8x8xf32>
    %109 = math.exp %108 : vector<8x8xf32>
    %cst_40 = arith.constant dense<0.000000e+00> : vector<8xf32>
    %110 = vector.multi_reduction <add>, %109, %cst_40 [1] : vector<8x8xf32> to vector<8xf32>
    %111 = vector.shape_cast %110 : vector<8xf32> to vector<8x1xf32>
    %112 = arith.truncf %109 : vector<8x8xf32> to vector<8x8xbf16>
    %cst_41 = arith.constant dense<0.000000e+00> : vector<8x8xf32>
    %113 = tpu.matmul %112, %97, %cst_41 {dimension_numbers = #tpu.dot_dimension_numbers<[1], [0], [0], [1], [0, 0, 1, 1], [], []>} : vector<8x8xbf16>, vector<8x8xbf16>, vector<8x8xf32> -> vector<8x8xf32>
    %114 = tpu.reciprocal %111 {approx = true} : vector<8x1xf32> -> vector<8x1xf32>
    %115 = vector.broadcast %114 : vector<8x1xf32> to vector<8x8xf32>
    %116 = arith.mulf %113, %115 : vector<8x8xf32>
    %117 = arith.truncf %116 : vector<8x8xf32> to vector<8x8xbf16>
    %c0_42 = arith.constant 0 : index
    %c24 = arith.constant 24 : index
    %118 = vector.load %arg18[%c0_42, %c24] : memref<8x32xbf16, #tpu.memory_space<vmem>>, vector<8x8xbf16>
    tpu.vector_store %arg18[%c0_42, %c24], %117 {strides = array<i32>} : memref<8x32xbf16, #tpu.memory_space<vmem>>, vector<8x8xbf16>,
    %c0_43 = arith.constant 0 : index
    %c0_44 = arith.constant 0 : index
    %119 = vector.load %arg18[%c0_43, %c0_44] : memref<8x32xbf16, #tpu.memory_space<vmem>>, vector<8x32xbf16>
    %c0_45 = arith.constant 0 : index
    %c0_46 = arith.constant 0 : index
    %120 = vector.load %arg14[%c0_45, %c0_46] : memref<32x32xbf16, #tpu.memory_space<vmem>>, vector<32x32xbf16>
    %cst_47 = arith.constant dense<0.000000e+00> : vector<8x32xf32>
    %121 = tpu.matmul %119, %120, %cst_47 {dimension_numbers = #tpu.dot_dimension_numbers<[1], [0], [0], [1], [0, 0, 1, 1], [], []>} : vector<8x32xbf16>, vector<32x32xbf16>, vector<8x32xf32> -> vector<8x32xf32>
    %122 = arith.addf %5, %121 : vector<8x32xf32>
    %123 = arith.mulf %122, %122 : vector<8x32xf32>
    %cst_48 = arith.constant dense<0.000000e+00> : vector<8xf32>
    %124 = vector.multi_reduction <add>, %123, %cst_48 [1] : vector<8x32xf32> to vector<8xf32>
    %125 = vector.shape_cast %124 : vector<8xf32> to vector<8x1xf32>
    %cst_49 = arith.constant 3.200000e+01 : f32
    %126 = vector.broadcast %cst_49 : f32 to vector<8x1xf32>
    %127 = arith.divf %125, %126 : vector<8x1xf32>
    %cst_50 = arith.constant 9.99999997E-7 : f32
    %128 = vector.broadcast %cst_50 : f32 to vector<8x1xf32>
    %129 = arith.addf %127, %128 : vector<8x1xf32>
    %130 = math.rsqrt %129 : vector<8x1xf32>
    %131 = vector.broadcast %130 : vector<8x1xf32> to vector<8x32xf32>
    %132 = arith.mulf %122, %131 : vector<8x32xf32>
    %c0_51 = arith.constant 0 : index
    %c0_52 = arith.constant 0 : index
    %133 = vector.load %arg15[%c0_51, %c0_52] : memref<1x32xf32, #tpu.memory_space<vmem>>, vector<1x32xf32>
    %134 = vector.broadcast %133 : vector<1x32xf32> to vector<8x32xf32>
    %135 = arith.mulf %132, %134 : vector<8x32xf32>
    %136 = arith.truncf %135 : vector<8x32xf32> to vector<8x32xbf16>
    %cst_53 = arith.constant 0.000000e+00 : f32
    %137 = vector.broadcast %cst_53 : f32 to vector<8x32xf32>
    %c0_54 = arith.constant 0 : index
    %c0_55 = arith.constant 0 : index
    %138 = vector.load %arg16[%c0_54, %c0_55] : memref<32x64xbf16, #tpu.memory_space<vmem>>, vector<32x64xbf16>
    %cst_56 = arith.constant dense<0.000000e+00> : vector<8x64xf32>
    %139 = tpu.matmul %136, %138, %cst_56 {dimension_numbers = #tpu.dot_dimension_numbers<[1], [0], [0], [1], [0, 0, 1, 1], [], []>} : vector<8x32xbf16>, vector<32x64xbf16>, vector<8x64xf32> -> vector<8x64xf32>
    %cst_57 = arith.constant 0.000000e+00 : f32
    %140 = vector.broadcast %cst_57 : f32 to vector<8x64xf32>
    %141 = arith.maximumf %139, %140 : vector<8x64xf32>
    %142 = arith.truncf %141 : vector<8x64xf32> to vector<8x64xbf16>
    %c0_58 = arith.constant 0 : index
    %c0_59 = arith.constant 0 : index
    %143 = vector.load %arg17[%c0_58, %c0_59] : memref<64x32xbf16, #tpu.memory_space<vmem>>, vector<64x32xbf16>
    %cst_60 = arith.constant dense<0.000000e+00> : vector<8x32xf32>
    %144 = tpu.matmul %142, %143, %cst_60 {dimension_numbers = #tpu.dot_dimension_numbers<[1], [0], [0], [1], [0, 0, 1, 1], [], []>} : vector<8x64xbf16>, vector<64x32xbf16>, vector<8x32xf32> -> vector<8x32xf32>
    %145 = arith.addf %137, %144 : vector<8x32xf32>
    %146 = arith.addf %122, %145 : vector<8x32xf32>
    %147 = arith.truncf %146 : vector<8x32xf32> to vector<8x32xbf16>
    %c0_61 = arith.constant 0 : index
    %c0_62 = arith.constant 0 : index
    %c0_63 = arith.constant 0 : index
    %148 = vector.load %arg10[%c0_61, %c0_62, %c0_63] : memref<1x8x32xbf16, #tpu.memory_space<vmem>>, vector<1x8x32xbf16>
    %149 = vector.shape_cast %148 : vector<1x8x32xbf16> to vector<8x32xbf16>
    %150 = vector.shape_cast %147 : vector<8x32xbf16> to vector<1x8x32xbf16>
    tpu.vector_store %arg10[%c0_61, %c0_62, %c0_63], %150 {strides = array<i32>} : memref<1x8x32xbf16, #tpu.memory_space<vmem>>, vector<1x8x32xbf16>,
    return
  }
  func.func @transform_0(%arg0: i32) -> (i32, i32, i32) {
    %c0_i32 = arith.constant 0 : i32
    %c0_i32_0 = arith.constant 0 : i32
    %c0_i32_1 = arith.constant 0 : i32
    return %arg0, %c0_i32, %c0_i32_0 : i32, i32, i32
  }
  func.func @transform_1(%arg0: i32) -> (i32, i32, i32) {
    %c0_i32 = arith.constant 0 : i32
    %c0_i32_0 = arith.constant 0 : i32
    %c0_i32_1 = arith.constant 0 : i32
    return %arg0, %c0_i32, %c0_i32_0 : i32, i32, i32
  }
  func.func @transform_9(%arg0: i32) -> (i32, i32, i32) {
    %c0_i32 = arith.constant 0 : i32
    %c0_i32_0 = arith.constant 0 : i32
    %c0_i32_1 = arith.constant 0 : i32
    return %arg0, %c0_i32, %c0_i32_0 : i32, i32, i32
  }
}

</mosaic_0001>

<llo_original>
// kernel: tpu_custom_call.1
$region0: #{tpu_custom_call.1}
  #allocation0 [shape = 'u32[]', space=smem, size = 0x4, offset = 0x4, fixed_abs, tag = 'smem constant byte address 0x4 - core index']
  #allocation1 [shape = 'u32[144,128]{1,0:T(1,128)}', space=vmem, size = 0x12000, scoped, tag = 'internal scratch']
  #allocation2 [shape = 'bf16[4,8,8]{2,1,0:T(8,128)(2,1)}', space=vmem, size = 0x2000, scoped, tag = 'scratch operand']
  #allocation3 [shape = 'f32[1,32]{1,0:T(1,128)}', space=vmem, size = 0x200, scoped, tag = 'scratch operand']
  #allocation4 [shape = 'bf16[32,96]{1,0:T(8,128)(2,1)}', space=vmem, size = 0x2000, scoped, tag = 'scratch operand']
  #allocation5 [shape = 'bf16[32,32]{1,0:T(8,128)(2,1)}', space=vmem, size = 0x2000, scoped, tag = 'scratch operand']
  #allocation6 [shape = 'f32[1,32]{1,0:T(1,128)}', space=vmem, size = 0x200, scoped, tag = 'scratch operand']
  #allocation7 [shape = 'bf16[32,64]{1,0:T(8,128)(2,1)}', space=vmem, size = 0x2000, scoped, tag = 'scratch operand']
  #allocation8 [shape = 'bf16[64,32]{1,0:T(8,128)(2,1)}', space=vmem, size = 0x4000, scoped, tag = 'scratch operand']
  #allocation9 [shape = 'bf16[8,32]{1,0:T(8,128)(2,1)}', space=vmem, size = 0x800, scoped, tag = 'scratch operand']
  #allocation10 [shape = 's32[7]{0}', space=sflag, size = 0x1c, scoped, tag = 'scratch operand']
  #allocation17 [shape = 's32[]', space=sflag, size = 0x4, offset = 0, fixed_abs, tag = 'sflag constant byte address 0x0 - dummy sync flag']
  #allocation18 [shape = 's32[]', space=sflag, size = 0x4, offset = 0, fixed_abs, tag = 'sflag constant byte address 0x0 - dummy sync flag']
  #allocation19 [shape = 's32[]', space=sflag, size = 0x4, offset = 0, fixed_abs, tag = 'sflag constant byte address 0x0 - dummy sync flag']
  #allocation20 [shape = 's32[]', space=sflag, size = 0x4, offset = 0, fixed_abs, tag = 'sflag constant byte address 0x0 - dummy sync flag']
  #allocation21 [shape = 's32[]', space=sflag, size = 0x4, offset = 0, fixed_abs, tag = 'sflag constant byte address 0x0 - dummy sync flag']
  #allocation22 [shape = 's32[]', space=sflag, size = 0x4, offset = 0, fixed_abs, tag = 'sflag constant byte address 0x0 - dummy sync flag']
  #allocation23 [shape = 's32[]', space=sflag, size = 0x4, offset = 0, fixed_abs, tag = 'sflag constant byte address 0x0 - dummy sync flag']
  #allocation24 [shape = 'u32[]', space=smem, size = 0x4, offset = 0x44, fixed_abs, tag = 'smem constant byte address 0x44 - assertion arg 0']
  #allocation25 [shape = 'u32[]', space=smem, size = 0x4, offset = 0x48, fixed_abs, tag = 'smem constant byte address 0x48 - assertion arg 1']
  #allocation26 [shape = 's32[]', space=sflag, size = 0x4, offset = 0, fixed_abs, tag = 'sflag constant byte address 0x0 - dummy sync flag']
  %s0 = inlined_call_operand.hbm [shape: bf16[2,8,32], index: 0, kind: input, shape index: {}]
  %s1 = inlined_call_operand.hbm [shape: f32[2,1,8], index: 1, kind: input, shape index: {}]
  %s2 = inlined_call_operand.vmem [shape: bf16[4,8,8], index: 2, kind: input, shape index: {}]
  %s3 = inlined_call_operand.vmem [shape: f32[1,32], index: 3, kind: input, shape index: {}]
  %s4 = inlined_call_operand.vmem [shape: bf16[32,96], index: 4, kind: input, shape index: {}]
  %s5 = inlined_call_operand.vmem [shape: bf16[32,32], index: 5, kind: input, shape index: {}]
  %s6 = inlined_call_operand.vmem [shape: f32[1,32], index: 6, kind: input, shape index: {}]
  %s7 = inlined_call_operand.hbm [shape: bf16[32,64], index: 7, kind: input, shape index: {}]
  %s8 = inlined_call_operand.vmem [shape: bf16[64,32], index: 8, kind: input, shape index: {}]
  %s9 = inlined_call_operand.hbm [shape: bf16[2,8,32], index: 9, kind: output, shape index: {}]
  %s10 = sld [smem:[#allocation0]]
  $region253: #{tpu_custom_call.1} parent=0
    _
  %s12 = ssub.s32 1, %s10
  %s13 = scalar_select 0, %s12, %s10
  $region1: #{tpu_custom_call.1} parent=0
    #allocation11 [shape = 'u8[4096]{0}', space=vmem, size = 0x1000, scoped, tag = 'input window, operand 0']
    #allocation12 [shape = 's32[2]{0}', space=sflag, size = 0x8, scoped, tag = 'scoped memory for tpu_custom_call.1']
    #allocation13 [shape = 's32[2]{0}', space=sflag, size = 0x8, scoped, tag = 'scoped memory for tpu_custom_call.1']
    #allocation14 [shape = 'u8[1024]{0}', space=vmem, size = 0x400, scoped, tag = 'input window, operand 1']
    #allocation15 [shape = 's32[2]{0}', space=sflag, size = 0x8, scoped, tag = 'scoped memory for tpu_custom_call.1']
    #allocation16 [shape = 'u8[4096]{0}', space=vmem, size = 0x1000, scoped, tag = 'output window, operand 0']
    %14 = vsyncpa [#allocation12], 0
    %s15 = scalar_lea.sflag [#allocation12], 1
    %16 = vsyncpa %s15, 0
    %17 = vsyncpa [#allocation15], 0
    %s18 = scalar_lea.sflag [#allocation15], 1
    %19 = vsyncpa %s18, 0
    %20 = vsyncpa [#allocation13], 0
    %s21 = scalar_lea.sflag [#allocation13], 1
    %22 = vsyncpa %s21, 0
    loop: start=0, step=1, limit=4
    $region2: #{tpu_custom_call.1} parent=1 // loop_pre_header
      _
    $region3: #{tpu_custom_call.1} parent=1 // loop_header
      %s24 = sphi 0, %s28
      %p25 = scmp.ge.s32.totalorder %s24, 4
      %s34 = sphi 0, %s36
      %s37 = sphi 0, %s34
      %s38 = sphi 0, %s37
      %s54 = sphi 0, %s38
      %s60 = sphi 0, %s62
      %s63 = sphi 0, %s60
      %s64 = sphi 0, %s63
      %s80 = sphi 0, %s64
      %s86 = sphi 0, %s88
      %s89 = sphi 0, %s86
      %s90 = sphi 0, %s89
      %s106 = sphi 0, %s90
    $region4: #{tpu_custom_call.1} parent=1 // loop_header_branch
      %27 = sbr.rel (%p25) target = $region8
    $region5: #{tpu_custom_call.1} parent=1 // loop_body
      %s29 = ssub.s32 %s24, 1
      %s30 = ssub.s32 %s24, 2
      %s31 = sadd.s32 %s24, 1
      %s32 = ssub.s32 %s24, %s31
      %p33 = scmp.eq.s32.totalorder %s32, 0
      %s35 = sadd.s32 %s34, 1
      %s36 = scalar_select %p33, %s34, %s35
      %p39 = pneg %p33
      %p40 = scmp.eq.s32.totalorder %s24, 1
      %p41 = por %p39, %p40
      %p42 = scmp.ne.s32.totalorder %s34, %s37
      %p43 = scmp.eq.s32.totalorder %s24, 0
      %p44 = por %p42, %p43
      %p45 = scmp.ne.s32.totalorder %s34, %s37
      %p46 = scmp.eq.s32.totalorder %s29, 1
      %p47 = por %p45, %p46
      %p48 = scmp.ne.s32.totalorder %s37, %s38
      %p49 = scmp.eq.s32.totalorder %s29, 0
      %p50 = por %p48, %p49
      %p51 = scmp.ne.s32.totalorder %s37, %s38
      %p52 = scmp.eq.s32.totalorder %s30, 1
      %p53 = por %p51, %p52
      %p55 = scmp.ne.s32.totalorder %s38, %s54
      %p56 = scmp.eq.s32.totalorder %s30, 0
      %p57 = por %p55, %p56
      %s58 = ssub.s32 %s24, %s31
      %p59 = scmp.eq.s32.totalorder %s58, 0
      %s61 = sadd.s32 %s60, 1
      %s62 = scalar_select %p59, %s60, %s61
      %p65 = pneg %p59
      %p66 = scmp.eq.s32.totalorder %s24, 1
      %p67 = por %p65, %p66
      %p68 = scmp.ne.s32.totalorder %s60, %s63
      %p69 = scmp.eq.s32.totalorder %s24, 0
      %p70 = por %p68, %p69
      %p71 = scmp.ne.s32.totalorder %s60, %s63
      %p72 = scmp.eq.s32.totalorder %s29, 1
      %p73 = por %p71, %p72
      %p74 = scmp.ne.s32.totalorder %s63, %s64
      %p75 = scmp.eq.s32.totalorder %s29, 0
      %p76 = por %p74, %p75
      %p77 = scmp.ne.s32.totalorder %s63, %s64
      %p78 = scmp.eq.s32.totalorder %s30, 1
      %p79 = por %p77, %p78
      %p81 = scmp.ne.s32.totalorder %s64, %s80
      %p82 = scmp.eq.s32.totalorder %s30, 0
      %p83 = por %p81, %p82
      %s84 = ssub.s32 %s24, %s31
      %p85 = scmp.eq.s32.totalorder %s84, 0
      %s87 = sadd.s32 %s86, 1
      %s88 = scalar_select %p85, %s86, %s87
      %p91 = pneg %p85
      %p92 = scmp.eq.s32.totalorder %s24, 1
      %p93 = por %p91, %p92
      %p94 = scmp.ne.s32.totalorder %s86, %s89
      %p95 = scmp.eq.s32.totalorder %s24, 0
      %p96 = por %p94, %p95
      %p97 = scmp.ne.s32.totalorder %s86, %s89
      %p98 = scmp.eq.s32.totalorder %s29, 1
      %p99 = por %p97, %p98
      %p100 = scmp.ne.s32.totalorder %s89, %s90
      %p101 = scmp.eq.s32.totalorder %s29, 0
      %p102 = por %p100, %p101
      %p103 = scmp.ne.s32.totalorder %s89, %s90
      %p104 = scmp.eq.s32.totalorder %s30, 1
      %p105 = por %p103, %p104
      %p107 = scmp.ne.s32.totalorder %s90, %s106
      %p108 = scmp.eq.s32.totalorder %s30, 0
      %p109 = por %p107, %p108
      %p110 = scmp.le.s32.totalorder 1, %s24
      %p111 = scmp.lt.s32.totalorder %s24, 3
      %p112 = pnand %p110, %p111
      %p113 = pneg %p112
      // Predicated region
      $region9: #{tpu_custom_call.1} parent=5 // pred_check
        _
      $region10: #{tpu_custom_call.1} parent=5 // pred_check_branch
        %115 = sbr.rel (%p112) target = $region12
      $region11: #{tpu_custom_call.1} parent=5 // pred_region
        %s116 = ssub.s32 %s24, 1
      $region12: #{tpu_custom_call.1} parent=5 // pred_fallthru
        _
      %p117 = scmp.lt.s32.totalorder %s24, 2
      // Predicated region
      $region13: #{tpu_custom_call.1} parent=5 // pred_check
        %p118 = pneg %p117
      $region14: #{tpu_custom_call.1} parent=5 // pred_check_branch
        %120 = sbr.rel (%p118) target = $region16
      $region15: #{tpu_custom_call.1} parent=5 // pred_region
        // Predicated region
        $region17: #{tpu_custom_call.1} parent=15 // pred_check
          %p121 = pneg %p44
        $region18: #{tpu_custom_call.1} parent=15 // pred_check_branch
          %123 = sbr.rel (%p121) target = $region20
        $region19: #{tpu_custom_call.1} parent=15 // pred_region
          %s124 = sand.u32 %s34, 1
          %s125 = scalar_lea.sflag [#allocation12], %s124
          %s126 = sand.u32 %s34, 1
          %s127 = smul.addr %s126, 4
          %s128 = scalar_lea.vmem [#allocation11], %s127
          %s130 = ssub.s32 64, 64
          %131 = vsyncadd %s125, %s130
          %s132 = smul.addr %s24, 64
          %s133 = scalar_lea.hbm %s0, %s132
          %s135 = sshll.u32 %s128, 4
          %s136 = int_to_ptr.vmem [resolvable:$true] %s135
          %138 = dma.hbm_to_vmem [thread:$0]  %s133, 64, %s136, %s125
        $region20: #{tpu_custom_call.1} parent=15 // pred_fallthru
          _
        // Predicated region
        $region21: #{tpu_custom_call.1} parent=15 // pred_check
          %p139 = pneg %p70
        $region22: #{tpu_custom_call.1} parent=15 // pred_check_branch
          %141 = sbr.rel (%p139) target = $region24
        $region23: #{tpu_custom_call.1} parent=15 // pred_region
          %s142 = sand.u32 %s60, 1
          %s143 = scalar_lea.sflag [#allocation15], %s142
          %s144 = sand.u32 %s60, 1
          %s145 = scalar_lea.vmem [#allocation14], %s144
          %s147 = ssub.s32 16, 16
          %148 = vsyncadd %s143, %s147
          %s149 = smul.addr %s24, 16
          %s150 = scalar_lea.hbm %s1, %s149
          %s152 = sshll.u32 %s145, 4
          %s153 = int_to_ptr.vmem [resolvable:$true] %s152
          %155 = dma.hbm_to_vmem [thread:$0]  %s150, 16, %s153, %s143
        $region24: #{tpu_custom_call.1} parent=15 // pred_fallthru
          _
      $region16: #{tpu_custom_call.1} parent=5 // pred_fallthru
        _
      %p156 = scmp.le.s32.totalorder 1, %s24
      %p157 = scmp.lt.s32.totalorder %s24, 3
      %p158 = pnand %p156, %p157
      %p159 = pneg %p158
      // Predicated region
      $region25: #{tpu_custom_call.1} parent=5 // pred_check
        _
      $region26: #{tpu_custom_call.1} parent=5 // pred_check_branch
        %161 = sbr.rel (%p158) target = $region28
      $region27: #{tpu_custom_call.1} parent=5 // pred_region
        %s162 = ssub.s32 %s24, 1
        %s163 = sand.u32 %s37, 1
        %s164 = scalar_lea.sflag [#allocation12], %s163
        %s165 = sand.u32 %s37, 1
        %s166 = smul.addr %s165, 4
        %s167 = scalar_lea.vmem [#allocation11], %s166
        // Predicated region
        $region29: #{tpu_custom_call.1} parent=27 // pred_check
          %p168 = pneg %p50
        $region30: #{tpu_custom_call.1} parent=27 // pred_check_branch
          %170 = sbr.rel (%p168) target = $region32
        $region31: #{tpu_custom_call.1} parent=27 // pred_region
          %171 = dma.done %s164, 64
        $region32: #{tpu_custom_call.1} parent=27 // pred_fallthru
          _
        %s172 = sand.u32 %s63, 1
        %s173 = scalar_lea.sflag [#allocation15], %s172
        %s174 = sand.u32 %s63, 1
        %s175 = scalar_lea.vmem [#allocation14], %s174
        // Predicated region
        $region33: #{tpu_custom_call.1} parent=27 // pred_check
          %p176 = pneg %p76
        $region34: #{tpu_custom_call.1} parent=27 // pred_check_branch
          %178 = sbr.rel (%p176) target = $region36
        $region35: #{tpu_custom_call.1} parent=27 // pred_region
          %179 = dma.done %s173, 16
        $region36: #{tpu_custom_call.1} parent=27 // pred_fallthru
          _
        %s180 = sand.u32 %s37, 1
        %s181 = scalar_lea.sflag [#allocation12], %s180
        %s182 = sand.u32 %s37, 1
        %s183 = smul.addr %s182, 4
        %s184 = scalar_lea.vmem [#allocation11], %s183
        %p185 = pneg %p50
        %p186 = pneg %p47
        %s187 = sand.u32 %s63, 1
        %s188 = scalar_lea.sflag [#allocation15], %s187
        %s189 = sand.u32 %s63, 1
        %s190 = scalar_lea.vmem [#allocation14], %s189
        %p191 = pneg %p76
        %p192 = pneg %p73
        %p193 = pneg %p102
        %p194 = pneg %p99
        %s195 = sand.u32 %s89, 1
        %s196 = scalar_lea.sflag [#allocation13], %s195
        %s197 = sand.u32 %s89, 1
        %s198 = smul.addr %s197, 4
        %s199 = scalar_lea.vmem [#allocation16], %s198
        %p201 = scmp.eq.s32.totalorder %s29, 0
        // Predicated region
        $region37: #{tpu_custom_call.1} parent=27 // pred_check
          %p202 = pneg %p201
        $region38: #{tpu_custom_call.1} parent=27 // pred_check_branch
          %204 = sbr.rel (%p202) target = $region40
        $region39: #{tpu_custom_call.1} parent=27 // pred_region
          %p206 = scmp.lt.u32.totalorder 16, 8
          %p207 = pneg %p206
          // Predicated region
          $region41: #{tpu_custom_call.1} parent=39 // pred_check
            _
          $region42: #{tpu_custom_call.1} parent=39 // pred_check_branch
            %209 = sbr.rel (%p206) target = $region44
          $region43: #{tpu_custom_call.1} parent=39 // pred_region
            %s225 = sand.u32 16, 7
            %p226 = scmp.eq.s32.totalorder %s225, 0
            // Predicated region
            $region56: #{tpu_custom_call.1} parent=43 // pred_check
              %p227 = pneg %p226
            $region57: #{tpu_custom_call.1} parent=43 // pred_check_branch
              %229 = sbr.rel (%p227) target = $region59
            $region58: #{tpu_custom_call.1} parent=43 // pred_region
              loop: start=0, step=1, limit=1
              $region60: #{tpu_custom_call.1} parent=58 // loop_pre_header
                _
              $region61: #{tpu_custom_call.1} parent=58 // loop_header
                %s231 = sphi 0, %s235
                %p232 = scmp.ge.s32.totalorder %s231, 1
                %s236 = sphi %s2, %s2
                %s237 = sphi [#allocation2], [#allocation2]
              $region62: #{tpu_custom_call.1} parent=58 // loop_header_branch
                %234 = sbr.rel (%p232) target = $region66
              $region63: #{tpu_custom_call.1} parent=58 // loop_body
                %v238 = vld [vmem:[%s236] sm:$0xff]
                %239 = vst [vmem:[%s237] sm:$0xff] %v238
                %v240 = vld [vmem:[%s236 + $0x8] sm:$0xff]
                %241 = vst [vmem:[%s237 + $0x8] sm:$0xff] %v240
              $region64: #{tpu_custom_call.1} parent=58 // loop_footer
                %s235 = sadd.s32 1, %s231
              $region65: #{tpu_custom_call.1} parent=58 // loop_footer_branch
                %230 = sbr.rel target = $region61
              $region66: #{tpu_custom_call.1} parent=58 // loop_exit
                _
            $region59: #{tpu_custom_call.1} parent=43 // pred_fallthru
              _
            %p242 = pneg %p226
            // Predicated region
            $region67: #{tpu_custom_call.1} parent=43 // pred_check
              _
            $region68: #{tpu_custom_call.1} parent=43 // pred_check_branch
              %244 = sbr.rel (%p226) target = $region70
            $region69: #{tpu_custom_call.1} parent=43 // pred_region
              %s245 = sand.u32 16, 7
            $region70: #{tpu_custom_call.1} parent=43 // pred_fallthru
              _
          $region44: #{tpu_custom_call.1} parent=39 // pred_fallthru
            _
          // Predicated region
          $region45: #{tpu_custom_call.1} parent=39 // pred_check
            %p210 = pneg %p206
          $region46: #{tpu_custom_call.1} parent=39 // pred_check_branch
            %212 = sbr.rel (%p210) target = $region48
          $region47: #{tpu_custom_call.1} parent=39 // pred_region
            %s213 = sshll.u32 1, 16
            %s214 = ssub.s32 %s213, 1
            loop: start=0, step=1, limit=1
            $region49: #{tpu_custom_call.1} parent=47 // loop_pre_header
              _
            $region50: #{tpu_custom_call.1} parent=47 // loop_header
              %s216 = sphi 0, %s220
              %p217 = scmp.ge.s32.totalorder %s216, 1
              %s221 = sphi %s2, %s2
              %s222 = sphi [#allocation2], [#allocation2]
            $region51: #{tpu_custom_call.1} parent=47 // loop_header_branch
              %219 = sbr.rel (%p217) target = $region55
            $region52: #{tpu_custom_call.1} parent=47 // loop_body
              %v223 = vld [vmem:[%s221] sm:%s214]
              %224 = vst [vmem:[%s222] sm:%s214] %v223
            $region53: #{tpu_custom_call.1} parent=47 // loop_footer
              %s220 = sadd.s32 1, %s216
            $region54: #{tpu_custom_call.1} parent=47 // loop_footer_branch
              %215 = sbr.rel target = $region50
            $region55: #{tpu_custom_call.1} parent=47 // loop_exit
              _
          $region48: #{tpu_custom_call.1} parent=39 // pred_fallthru
            _
          // Predicated region
          $region71: #{tpu_custom_call.1} parent=39 // pred_check
            _
          $region72: #{tpu_custom_call.1} parent=39 // pred_check_branch
            %248 = sbr.rel (0) target = $region74
          $region73: #{tpu_custom_call.1} parent=39 // pred_region
            %249 = vsyncadd [#allocation10], 256
          $region74: #{tpu_custom_call.1} parent=39 // pred_fallthru
            _
          %s250 = scalar_lea.sflag [#allocation10], 1
          %p252 = scmp.lt.u32.totalorder 1, 8
          %p253 = pneg %p252
          // Predicated region
          $region75: #{tpu_custom_call.1} parent=39 // pred_check
            _
          $region76: #{tpu_custom_call.1} parent=39 // pred_check_branch
            %255 = sbr.rel (%p252) target = $region78
          $region77: #{tpu_custom_call.1} parent=39 // pred_region
            %s271 = sand.u32 1, 7
            %p272 = scmp.eq.s32.totalorder %s271, 0
            %p273 = pneg %p272
            // Predicated region
            $region90: #{tpu_custom_call.1} parent=77 // pred_check
              _
            $region91: #{tpu_custom_call.1} parent=77 // pred_check_branch
              %275 = sbr.rel (%p272) target = $region93
            $region92: #{tpu_custom_call.1} parent=77 // pred_region
              %s276 = sand.u32 1, 7
              %s277 = ssub.s32 1, %s276
              %s278 = scalar_lea.vmem %s3, %s277
              %s279 = ssub.s32 1, %s276
              %s280 = scalar_lea.vmem [#allocation3], %s279
              %s281 = sshll.u32 1, %s276
              %s282 = ssub.s32 %s281, 1
              loop: start=0, step=1, limit=1
              $region94: #{tpu_custom_call.1} parent=92 // loop_pre_header
                _
              $region95: #{tpu_custom_call.1} parent=92 // loop_header
                %s284 = sphi 0, %s288
                %p285 = scmp.ge.s32.totalorder %s284, 1
                %s289 = sphi %s278, %s278
                %s290 = sphi %s280, %s280
              $region96: #{tpu_custom_call.1} parent=92 // loop_header_branch
                %287 = sbr.rel (%p285) target = $region100
              $region97: #{tpu_custom_call.1} parent=92 // loop_body
                %v291 = vld [vmem:[%s289] sm:%s282]
                %292 = vst [vmem:[%s290] sm:%s282] %v291
              $region98: #{tpu_custom_call.1} parent=92 // loop_footer
                %s288 = sadd.s32 1, %s284
              $region99: #{tpu_custom_call.1} parent=92 // loop_footer_branch
                %283 = sbr.rel target = $region95
              $region100: #{tpu_custom_call.1} parent=92 // loop_exit
                _
            $region93: #{tpu_custom_call.1} parent=77 // pred_fallthru
              _
          $region78: #{tpu_custom_call.1} parent=39 // pred_fallthru
            _
          // Predicated region
          $region79: #{tpu_custom_call.1} parent=39 // pred_check
            %p256 = pneg %p252
          $region80: #{tpu_custom_call.1} parent=39 // pred_check_branch
            %258 = sbr.rel (%p256) target = $region82
          $region81: #{tpu_custom_call.1} parent=39 // pred_region
            %s259 = sshll.u32 1, 1
            %s260 = ssub.s32 %s259, 1
            loop: start=0, step=1, limit=1
            $region83: #{tpu_custom_call.1} parent=81 // loop_pre_header
              _
            $region84: #{tpu_custom_call.1} parent=81 // loop_header
              %s262 = sphi 0, %s266
              %p263 = scmp.ge.s32.totalorder %s262, 1
              %s267 = sphi %s3, %s3
              %s268 = sphi [#allocation3], [#allocation3]
            $region85: #{tpu_custom_call.1} parent=81 // loop_header_branch
              %265 = sbr.rel (%p263) target = $region89
            $region86: #{tpu_custom_call.1} parent=81 // loop_body
              %v269 = vld [vmem:[%s267] sm:%s260]
              %270 = vst [vmem:[%s268] sm:%s260] %v269
            $region87: #{tpu_custom_call.1} parent=81 // loop_footer
              %s266 = sadd.s32 1, %s262
            $region88: #{tpu_custom_call.1} parent=81 // loop_footer_branch
              %261 = sbr.rel target = $region84
            $region89: #{tpu_custom_call.1} parent=81 // loop_exit
              _
          $region82: #{tpu_custom_call.1} parent=39 // pred_fallthru
            _
          // Predicated region
          $region101: #{tpu_custom_call.1} parent=39 // pred_check
            _
          $region102: #{tpu_custom_call.1} parent=39 // pred_check_branch
            %295 = sbr.rel (0) target = $region104
          $region103: #{tpu_custom_call.1} parent=39 // pred_region
            %296 = vsyncadd %s250, 16
          $region104: #{tpu_custom_call.1} parent=39 // pred_fallthru
            _
          %s297 = scalar_lea.sflag [#allocation10], 2
          %p299 = scmp.lt.u32.totalorder 16, 8
          %p300 = pneg %p299
          // Predicated region
          $region105: #{tpu_custom_call.1} parent=39 // pred_check
            _
          $region106: #{tpu_custom_call.1} parent=39 // pred_check_branch
            %302 = sbr.rel (%p299) target = $region108
          $region107: #{tpu_custom_call.1} parent=39 // pred_region
            %s318 = sand.u32 16, 7
            %p319 = scmp.eq.s32.totalorder %s318, 0
            // Predicated region
            $region120: #{tpu_custom_call.1} parent=107 // pred_check
              %p320 = pneg %p319
            $region121: #{tpu_custom_call.1} parent=107 // pred_check_branch
              %322 = sbr.rel (%p320) target = $region123
            $region122: #{tpu_custom_call.1} parent=107 // pred_region
              loop: start=0, step=1, limit=1
              $region124: #{tpu_custom_call.1} parent=122 // loop_pre_header
                _
              $region125: #{tpu_custom_call.1} parent=122 // loop_header
                %s324 = sphi 0, %s328
                %p325 = scmp.ge.s32.totalorder %s324, 1
                %s329 = sphi %s4, %s4
                %s330 = sphi [#allocation4], [#allocation4]
              $region126: #{tpu_custom_call.1} parent=122 // loop_header_branch
                %327 = sbr.rel (%p325) target = $region130
              $region127: #{tpu_custom_call.1} parent=122 // loop_body
                %v331 = vld [vmem:[%s329] sm:$0xff]
                %332 = vst [vmem:[%s330] sm:$0xff] %v331
                %v333 = vld [vmem:[%s329 + $0x8] sm:$0xff]
                %334 = vst [vmem:[%s330 + $0x8] sm:$0xff] %v333
              $region128: #{tpu_custom_call.1} parent=122 // loop_footer
                %s328 = sadd.s32 1, %s324
              $region129: #{tpu_custom_call.1} parent=122 // loop_footer_branch
                %323 = sbr.rel target = $region125
              $region130: #{tpu_custom_call.1} parent=122 // loop_exit
                _
            $region123: #{tpu_custom_call.1} parent=107 // pred_fallthru
              _
            %p335 = pneg %p319
            // Predicated region
            $region131: #{tpu_custom_call.1} parent=107 // pred_check
              _
            $region132: #{tpu_custom_call.1} parent=107 // pred_check_branch
              %337 = sbr.rel (%p319) target = $region134
            $region133: #{tpu_custom_call.1} parent=107 // pred_region
              %s338 = sand.u32 16, 7
            $region134: #{tpu_custom_call.1} parent=107 // pred_fallthru
              _
          $region108: #{tpu_custom_call.1} parent=39 // pred_fallthru
            _
          // Predicated region
          $region109: #{tpu_custom_call.1} parent=39 // pred_check
            %p303 = pneg %p299
          $region110: #{tpu_custom_call.1} parent=39 // pred_check_branch
            %305 = sbr.rel (%p303) target = $region112
          $region111: #{tpu_custom_call.1} parent=39 // pred_region
            %s306 = sshll.u32 1, 16
            %s307 = ssub.s32 %s306, 1
            loop: start=0, step=1, limit=1
            $region113: #{tpu_custom_call.1} parent=111 // loop_pre_header
              _
            $region114: #{tpu_custom_call.1} parent=111 // loop_header
              %s309 = sphi 0, %s313
              %p310 = scmp.ge.s32.totalorder %s309, 1
              %s314 = sphi %s4, %s4
              %s315 = sphi [#allocation4], [#allocation4]
            $region115: #{tpu_custom_call.1} parent=111 // loop_header_branch
              %312 = sbr.rel (%p310) target = $region119
            $region116: #{tpu_custom_call.1} parent=111 // loop_body
              %v316 = vld [vmem:[%s314] sm:%s307]
              %317 = vst [vmem:[%s315] sm:%s307] %v316
            $region117: #{tpu_custom_call.1} parent=111 // loop_footer
              %s313 = sadd.s32 1, %s309
            $region118: #{tpu_custom_call.1} parent=111 // loop_footer_branch
              %308 = sbr.rel target = $region114
            $region119: #{tpu_custom_call.1} parent=111 // loop_exit
              _
          $region112: #{tpu_custom_call.1} parent=39 // pred_fallthru
            _
          // Predicated region
          $region135: #{tpu_custom_call.1} parent=39 // pred_check
            _
          $region136: #{tpu_custom_call.1} parent=39 // pred_check_branch
            %341 = sbr.rel (0) target = $region138
          $region137: #{tpu_custom_call.1} parent=39 // pred_region
            %342 = vsyncadd %s297, 256
          $region138: #{tpu_custom_call.1} parent=39 // pred_fallthru
            _
          %s343 = scalar_lea.sflag [#allocation10], 3
          %p345 = scmp.lt.u32.totalorder 16, 8
          %p346 = pneg %p345
          // Predicated region
          $region139: #{tpu_custom_call.1} parent=39 // pred_check
            _
          $region140: #{tpu_custom_call.1} parent=39 // pred_check_branch
            %348 = sbr.rel (%p345) target = $region142
          $region141: #{tpu_custom_call.1} parent=39 // pred_region
            %s364 = sand.u32 16, 7
            %p365 = scmp.eq.s32.totalorder %s364, 0
            // Predicated region
            $region154: #{tpu_custom_call.1} parent=141 // pred_check
              %p366 = pneg %p365
            $region155: #{tpu_custom_call.1} parent=141 // pred_check_branch
              %368 = sbr.rel (%p366) target = $region157
            $region156: #{tpu_custom_call.1} parent=141 // pred_region
              loop: start=0, step=1, limit=1
              $region158: #{tpu_custom_call.1} parent=156 // loop_pre_header
                _
              $region159: #{tpu_custom_call.1} parent=156 // loop_header
                %s370 = sphi 0, %s374
                %p371 = scmp.ge.s32.totalorder %s370, 1
                %s375 = sphi %s5, %s5
                %s376 = sphi [#allocation5], [#allocation5]
              $region160: #{tpu_custom_call.1} parent=156 // loop_header_branch
                %373 = sbr.rel (%p371) target = $region164
              $region161: #{tpu_custom_call.1} parent=156 // loop_body
                %v377 = vld [vmem:[%s375] sm:$0xff]
                %378 = vst [vmem:[%s376] sm:$0xff] %v377
                %v379 = vld [vmem:[%s375 + $0x8] sm:$0xff]
                %380 = vst [vmem:[%s376 + $0x8] sm:$0xff] %v379
              $region162: #{tpu_custom_call.1} parent=156 // loop_footer
                %s374 = sadd.s32 1, %s370
              $region163: #{tpu_custom_call.1} parent=156 // loop_footer_branch
                %369 = sbr.rel target = $region159
              $region164: #{tpu_custom_call.1} parent=156 // loop_exit
                _
            $region157: #{tpu_custom_call.1} parent=141 // pred_fallthru
              _
            %p381 = pneg %p365
            // Predicated region
            $region165: #{tpu_custom_call.1} parent=141 // pred_check
              _
            $region166: #{tpu_custom_call.1} parent=141 // pred_check_branch
              %383 = sbr.rel (%p365) target = $region168
            $region167: #{tpu_custom_call.1} parent=141 // pred_region
              %s384 = sand.u32 16, 7
            $region168: #{tpu_custom_call.1} parent=141 // pred_fallthru
              _
          $region142: #{tpu_custom_call.1} parent=39 // pred_fallthru
            _
          // Predicated region
          $region143: #{tpu_custom_call.1} parent=39 // pred_check
            %p349 = pneg %p345
          $region144: #{tpu_custom_call.1} parent=39 // pred_check_branch
            %351 = sbr.rel (%p349) target = $region146
          $region145: #{tpu_custom_call.1} parent=39 // pred_region
            %s352 = sshll.u32 1, 16
            %s353 = ssub.s32 %s352, 1
            loop: start=0, step=1, limit=1
            $region147: #{tpu_custom_call.1} parent=145 // loop_pre_header
              _
            $region148: #{tpu_custom_call.1} parent=145 // loop_header
              %s355 = sphi 0, %s359
              %p356 = scmp.ge.s32.totalorder %s355, 1
              %s360 = sphi %s5, %s5
              %s361 = sphi [#allocation5], [#allocation5]
            $region149: #{tpu_custom_call.1} parent=145 // loop_header_branch
              %358 = sbr.rel (%p356) target = $region153
            $region150: #{tpu_custom_call.1} parent=145 // loop_body
              %v362 = vld [vmem:[%s360] sm:%s353]
              %363 = vst [vmem:[%s361] sm:%s353] %v362
            $region151: #{tpu_custom_call.1} parent=145 // loop_footer
              %s359 = sadd.s32 1, %s355
            $region152: #{tpu_custom_call.1} parent=145 // loop_footer_branch
              %354 = sbr.rel target = $region148
            $region153: #{tpu_custom_call.1} parent=145 // loop_exit
              _
          $region146: #{tpu_custom_call.1} parent=39 // pred_fallthru
            _
          // Predicated region
          $region169: #{tpu_custom_call.1} parent=39 // pred_check
            _
          $region170: #{tpu_custom_call.1} parent=39 // pred_check_branch
            %387 = sbr.rel (0) target = $region172
          $region171: #{tpu_custom_call.1} parent=39 // pred_region
            %388 = vsyncadd %s343, 256
          $region172: #{tpu_custom_call.1} parent=39 // pred_fallthru
            _
          %s389 = scalar_lea.sflag [#allocation10], 4
          %p391 = scmp.lt.u32.totalorder 1, 8
          %p392 = pneg %p391
          // Predicated region
          $region173: #{tpu_custom_call.1} parent=39 // pred_check
            _
          $region174: #{tpu_custom_call.1} parent=39 // pred_check_branch
            %394 = sbr.rel (%p391) target = $region176
          $region175: #{tpu_custom_call.1} parent=39 // pred_region
            %s410 = sand.u32 1, 7
            %p411 = scmp.eq.s32.totalorder %s410, 0
            %p412 = pneg %p411
            // Predicated region
            $region188: #{tpu_custom_call.1} parent=175 // pred_check
              _
            $region189: #{tpu_custom_call.1} parent=175 // pred_check_branch
              %414 = sbr.rel (%p411) target = $region191
            $region190: #{tpu_custom_call.1} parent=175 // pred_region
              %s415 = sand.u32 1, 7
              %s416 = ssub.s32 1, %s415
              %s417 = scalar_lea.vmem %s6, %s416
              %s418 = ssub.s32 1, %s415
              %s419 = scalar_lea.vmem [#allocation6], %s418
              %s420 = sshll.u32 1, %s415
              %s421 = ssub.s32 %s420, 1
              loop: start=0, step=1, limit=1
              $region192: #{tpu_custom_call.1} parent=190 // loop_pre_header
                _
              $region193: #{tpu_custom_call.1} parent=190 // loop_header
                %s423 = sphi 0, %s427
                %p424 = scmp.ge.s32.totalorder %s423, 1
                %s428 = sphi %s417, %s417
                %s429 = sphi %s419, %s419
              $region194: #{tpu_custom_call.1} parent=190 // loop_header_branch
                %426 = sbr.rel (%p424) target = $region198
              $region195: #{tpu_custom_call.1} parent=190 // loop_body
                %v430 = vld [vmem:[%s428] sm:%s421]
                %431 = vst [vmem:[%s429] sm:%s421] %v430
              $region196: #{tpu_custom_call.1} parent=190 // loop_footer
                %s427 = sadd.s32 1, %s423
              $region197: #{tpu_custom_call.1} parent=190 // loop_footer_branch
                %422 = sbr.rel target = $region193
              $region198: #{tpu_custom_call.1} parent=190 // loop_exit
                _
            $region191: #{tpu_custom_call.1} parent=175 // pred_fallthru
              _
          $region176: #{tpu_custom_call.1} parent=39 // pred_fallthru
            _
          // Predicated region
          $region177: #{tpu_custom_call.1} parent=39 // pred_check
            %p395 = pneg %p391
          $region178: #{tpu_custom_call.1} parent=39 // pred_check_branch
            %397 = sbr.rel (%p395) target = $region180
          $region179: #{tpu_custom_call.1} parent=39 // pred_region
            %s398 = sshll.u32 1, 1
            %s399 = ssub.s32 %s398, 1
            loop: start=0, step=1, limit=1
            $region181: #{tpu_custom_call.1} parent=179 // loop_pre_header
              _
            $region182: #{tpu_custom_call.1} parent=179 // loop_header
              %s401 = sphi 0, %s405
              %p402 = scmp.ge.s32.totalorder %s401, 1
              %s406 = sphi %s6, %s6
              %s407 = sphi [#allocation6], [#allocation6]
            $region183: #{tpu_custom_call.1} parent=179 // loop_header_branch
              %404 = sbr.rel (%p402) target = $region187
            $region184: #{tpu_custom_call.1} parent=179 // loop_body
              %v408 = vld [vmem:[%s406] sm:%s399]
              %409 = vst [vmem:[%s407] sm:%s399] %v408
            $region185: #{tpu_custom_call.1} parent=179 // loop_footer
              %s405 = sadd.s32 1, %s401
            $region186: #{tpu_custom_call.1} parent=179 // loop_footer_branch
              %400 = sbr.rel target = $region182
            $region187: #{tpu_custom_call.1} parent=179 // loop_exit
              _
          $region180: #{tpu_custom_call.1} parent=39 // pred_fallthru
            _
          // Predicated region
          $region199: #{tpu_custom_call.1} parent=39 // pred_check
            _
          $region200: #{tpu_custom_call.1} parent=39 // pred_check_branch
            %434 = sbr.rel (0) target = $region202
          $region201: #{tpu_custom_call.1} parent=39 // pred_region
            %435 = vsyncadd %s389, 16
          $region202: #{tpu_custom_call.1} parent=39 // pred_fallthru
            _
          %s436 = scalar_lea.sflag [#allocation10], 5
          // Predicated region
          $region203: #{tpu_custom_call.1} parent=39 // pred_check
            _
          $region204: #{tpu_custom_call.1} parent=39 // pred_check_branch
            %438 = sbr.rel target = $region206
          $region205: #{tpu_custom_call.1} parent=39 // pred_region
            %439 = sst [smem:[#allocation24]] [#allocation23]
            %440 = sst [smem:[#allocation25]] [#allocation22]
          $region206: #{tpu_custom_call.1} parent=39 // pred_fallthru
            _
          %442 = shalt.err (0)
          %s444 = sshll.u32 [#allocation7], 4
          %s445 = int_to_ptr.vmem [resolvable:$true] %s444
          %447 = dma.hbm_to_vmem [thread:$0]  %s7, 256, %s445, %s436
          %s448 = scalar_lea.sflag [#allocation10], 6
          %p450 = scmp.lt.u32.totalorder 32, 8
          %p451 = pneg %p450
          // Predicated region
          $region207: #{tpu_custom_call.1} parent=39 // pred_check
            _
          $region208: #{tpu_custom_call.1} parent=39 // pred_check_branch
            %453 = sbr.rel (%p450) target = $region210
          $region209: #{tpu_custom_call.1} parent=39 // pred_region
            %s469 = sand.u32 32, 7
            %p470 = scmp.eq.s32.totalorder %s469, 0
            // Predicated region
            $region222: #{tpu_custom_call.1} parent=209 // pred_check
              %p471 = pneg %p470
            $region223: #{tpu_custom_call.1} parent=209 // pred_check_branch
              %473 = sbr.rel (%p471) target = $region225
            $region224: #{tpu_custom_call.1} parent=209 // pred_region
              loop: start=0, step=1, limit=1
              $region226: #{tpu_custom_call.1} parent=224 // loop_pre_header
                _
              $region227: #{tpu_custom_call.1} parent=224 // loop_header
                %s475 = sphi 0, %s479
                %p476 = scmp.ge.s32.totalorder %s475, 1
                %s480 = sphi %s8, %s8
                %s481 = sphi [#allocation8], [#allocation8]
              $region228: #{tpu_custom_call.1} parent=224 // loop_header_branch
                %478 = sbr.rel (%p476) target = $region232
              $region229: #{tpu_custom_call.1} parent=224 // loop_body
                %v482 = vld [vmem:[%s480] sm:$0xff]
                %483 = vst [vmem:[%s481] sm:$0xff] %v482
                %v484 = vld [vmem:[%s480 + $0x8] sm:$0xff]
                %485 = vst [vmem:[%s481 + $0x8] sm:$0xff] %v484
                %v486 = vld [vmem:[%s480 + $0x10] sm:$0xff]
                %487 = vst [vmem:[%s481 + $0x10] sm:$0xff] %v486
                %v488 = vld [vmem:[%s480 + $0x18] sm:$0xff]
                %489 = vst [vmem:[%s481 + $0x18] sm:$0xff] %v488
              $region230: #{tpu_custom_call.1} parent=224 // loop_footer
                %s479 = sadd.s32 1, %s475
              $region231: #{tpu_custom_call.1} parent=224 // loop_footer_branch
                %474 = sbr.rel target = $region227
              $region232: #{tpu_custom_call.1} parent=224 // loop_exit
                _
            $region225: #{tpu_custom_call.1} parent=209 // pred_fallthru
              _
            %p490 = pneg %p470
            // Predicated region
            $region233: #{tpu_custom_call.1} parent=209 // pred_check
              _
            $region234: #{tpu_custom_call.1} parent=209 // pred_check_branch
              %492 = sbr.rel (%p470) target = $region236
            $region235: #{tpu_custom_call.1} parent=209 // pred_region
              %s493 = sand.u32 32, 7
            $region236: #{tpu_custom_call.1} parent=209 // pred_fallthru
              _
          $region210: #{tpu_custom_call.1} parent=39 // pred_fallthru
            _
          // Predicated region
          $region211: #{tpu_custom_call.1} parent=39 // pred_check
            %p454 = pneg %p450
          $region212: #{tpu_custom_call.1} parent=39 // pred_check_branch
            %456 = sbr.rel (%p454) target = $region214
          $region213: #{tpu_custom_call.1} parent=39 // pred_region
            %s457 = sshll.u32 1, 32
            %s458 = ssub.s32 %s457, 1
            loop: start=0, step=1, limit=1
            $region215: #{tpu_custom_call.1} parent=213 // loop_pre_header
              _
            $region216: #{tpu_custom_call.1} parent=213 // loop_header
              %s460 = sphi 0, %s464
              %p461 = scmp.ge.s32.totalorder %s460, 1
              %s465 = sphi %s8, %s8
              %s466 = sphi [#allocation8], [#allocation8]
            $region217: #{tpu_custom_call.1} parent=213 // loop_header_branch
              %463 = sbr.rel (%p461) target = $region221
            $region218: #{tpu_custom_call.1} parent=213 // loop_body
              %v467 = vld [vmem:[%s465] sm:%s458]
              %468 = vst [vmem:[%s466] sm:%s458] %v467
            $region219: #{tpu_custom_call.1} parent=213 // loop_footer
              %s464 = sadd.s32 1, %s460
            $region220: #{tpu_custom_call.1} parent=213 // loop_footer_branch
              %459 = sbr.rel target = $region216
            $region221: #{tpu_custom_call.1} parent=213 // loop_exit
              _
          $region214: #{tpu_custom_call.1} parent=39 // pred_fallthru
            _
          // Predicated region
          $region237: #{tpu_custom_call.1} parent=39 // pred_check
            _
          $region238: #{tpu_custom_call.1} parent=39 // pred_check_branch
            %496 = sbr.rel (0) target = $region240
          $region239: #{tpu_custom_call.1} parent=39 // pred_region
            %497 = vsyncadd %s448, 512
          $region240: #{tpu_custom_call.1} parent=39 // pred_fallthru
            _
          %s498 = smul.u32 4, 4
          %s499 = smul.u32 %s498, 1
          %s500 = smul.u32 %s499, 1
          %s501 = sshll.u32 %s500, 4
          %502 = dma.done [#allocation10], %s501
          %s503 = smul.u32 1, 1
          %s504 = sshll.u32 %s503, 4
          %505 = dma.done %s250, %s504
          %s506 = sshll.u32 %s499, 4
          %507 = dma.done %s297, %s506
          %s508 = sshll.u32 %s499, 4
          %509 = dma.done %s343, %s508
          %s510 = sshll.u32 %s503, 4
          %511 = dma.done %s389, %s510
          %s512 = sshll.u32 %s499, 4
          %513 = dma.done %s436, %s512
          %s514 = smul.u32 4, 8
          %s515 = smul.u32 %s514, 1
          %s516 = sshll.u32 %s515, 4
          %517 = dma.done %s448, %s516
        $region40: #{tpu_custom_call.1} parent=27 // pred_fallthru
          _
        %v518 = vld [vmem:[%s167] sm:$0xf]
        %v519 = vunpack.c.l.bf16 %v518
        %v520 = vld [vmem:[%s175] sm:$0x1]
        %v521 = vmul.f32 %v519, %v519
        %vm522 = vcmask 261120
        %v523 = vsel %vm522, %v521, 0.0
        %524 = vadd.xlane.f32.xlu0 %v523
        %v525 = vpop.xlane.xlu0 %524
        %v526 = vrcp.pop 32.0
        %v527 = vmul.f32 %v525, %v526
        %v528 = vadd.f32 %v527, 1e-06
        %v529 = vrsqrt.pop %v528
        %v530 = vmul.f32 %v519, %v529
        %v531 = vld [vmem:[#allocation3] sm:$0x1]
        %v533 = vlaneseq
        %v534 = vshrl.u32 %v533, 7
        %v535 = vsub.s32 0, %v534
        %v536 = vrot.slane %v531, %v535
        %v538 = vmul.f32 %v530, %v536
        %v539 = vpack.c.bf16 %v538, %v538
        %v540 = vld [vmem:[#allocation4] sm:$0xf]
        %v541 = vld [vmem:[#allocation4 + $0x4] sm:$0xf]
        %v542 = vld [vmem:[#allocation4 + $0x8] sm:$0xf]
        %v543 = vld [vmem:[#allocation4 + $0xc] sm:$0xf]
        %v548 = vunpack.c.l.b16 %v540
        %v549 = vunpack.c.l.b16 %v541
        %v550 = vunpack.c.l.b16 %v542
        %v551 = vunpack.c.l.b16 %v543
        %v552 = vpack.c.b16 %v549, %v548
        %v553 = vpack.c.b16 %v551, %v550
        %v557 = vsel %vm522, %v539, 0
        %559 = vmatprep.subr.bf16.mxu0 0
        %560 = vmatpush1.bf16.msra.mxu0 0
        %561 = vmatprep.subr.bf16.mxu0 0
        %562 = vmatpush1.bf16.msra.mxu0 0
        %563 = vmatprep.subr.bf16.mxu0 0
        %564 = vmatpush1.bf16.msra.mxu0 0
        %565 = vmatprep.subr.bf16.mxu0 0
        %566 = vmatpush1.bf16.msra.mxu0 0
        %567 = vmatprep.subr.bf16.mxu0 0
        %568 = vmatpush1.bf16.msra.mxu0 0
        %569 = vmatprep.subr.bf16.mxu0 0
        %570 = vmatpush1.bf16.msra.mxu0 0
        %571 = vmatprep.subr.bf16.mxu0 0
        %572 = vmatpush1.bf16.msra.mxu0 %v553
        %573 = vmatprep.subr.bf16.mxu0 0
        %574 = vmatpush1.bf16.msra.mxu0 %v552
        %575 = vmatprep.subr.bf16.mxu0 0
        %576 = vmatpush2.bf16.msra.mxu0 0
        %577 = vmatprep.subr.bf16.mxu0 0
        %578 = vmatpush2.bf16.msra.mxu0 0
        %579 = vmatprep.subr.bf16.mxu0 0
        %580 = vmatpush2.bf16.msra.mxu0 0
        %581 = vmatprep.subr.bf16.mxu0 0
        %582 = vmatpush2.bf16.msra.mxu0 0
        %583 = vmatprep.subr.bf16.mxu0 0
        %584 = vmatpush2.bf16.msra.mxu0 0
        %585 = vmatprep.subr.bf16.mxu0 0
        %586 = vmatpush2.bf16.msra.mxu0 0
        %587 = vmatprep.subr.bf16.mxu0 0
        %588 = vmatpush2.bf16.msra.mxu0 0
        %589 = vmatprep.subr.bf16.mxu0 0
        %590 = vmatpush2.bf16.msra.mxu0 0
        %591 = vmatprep.mubr.bf16.mxu0 0
        %592 = vmatmul.mubr.bf16.gmra.mxu0 %v557
        %v593 = vpop.f32.mrf.mxu0
        %v594 = vadd.f32 0.0, %v593
        %v595 = vpop.f32.mrf.mxu0
        %v596 = vpop.f32.mrf.mxu0
        %v597 = vpop.f32.mrf.mxu0
        %598 = vdwg.mxu0
        %v599 = vpack.c.bf16 %v594, %v594
        %v601 = vlaneseq
        %v602 = vshrl.u32 %v601, 7
        %v603 = vsub.s32 0, %v602
        %v604 = vrot.slane %v520, %v603
        %v606 = vld [vmem:[#allocation2] sm:$0xf]
        %v607 = vunpack.c.l.bf16 %v606
        %609 = vrot.lane.b32.xlu0 %v599, 96
        %v610 = vpop.permute.xlu0 %609
        %vm611 = vcmask 64512
        %v613 = vsel %vm611, %v599, 0
        %v616 = vsel %vm611, %v610, 0
        %618 = vmatprep.subr.bf16.mxu0 0
        %619 = vmatpush1.bf16.xpose.msra.mxu0 0
        %620 = vmatprep.subr.bf16.mxu0 0
        %621 = vmatpush1.bf16.xpose.msra.mxu0 0
        %622 = vmatprep.subr.bf16.mxu0 0
        %623 = vmatpush1.bf16.xpose.msra.mxu0 0
        %624 = vmatprep.subr.bf16.mxu0 0
        %625 = vmatpush1.bf16.xpose.msra.mxu0 0
        %626 = vmatprep.subr.bf16.mxu0 0
        %627 = vmatpush1.bf16.xpose.msra.mxu0 0
        %628 = vmatprep.subr.bf16.mxu0 0
        %629 = vmatpush1.bf16.xpose.msra.mxu0 0
        %630 = vmatprep.subr.bf16.mxu0 0
        %631 = vmatpush1.bf16.xpose.msra.mxu0 0
        %632 = vmatprep.subr.bf16.mxu0 0
        %633 = vmatpush1.bf16.xpose.msra.mxu0 %v616
        %634 = vmatprep.subr.bf16.mxu0 0
        %635 = vmatpush2.bf16.xpose.msra.mxu0 0
        %636 = vmatprep.subr.bf16.mxu0 0
        %637 = vmatpush2.bf16.xpose.msra.mxu0 0
        %638 = vmatprep.subr.bf16.mxu0 0
        %639 = vmatpush2.bf16.xpose.msra.mxu0 0
        %640 = vmatprep.subr.bf16.mxu0 0
        %641 = vmatpush2.bf16.xpose.msra.mxu0 0
        %642 = vmatprep.subr.bf16.mxu0 0
        %643 = vmatpush2.bf16.xpose.msra.mxu0 0
        %644 = vmatprep.subr.bf16.mxu0 0
        %645 = vmatpush2.bf16.xpose.msra.mxu0 0
        %646 = vmatprep.subr.bf16.mxu0 0
        %647 = vmatpush2.bf16.xpose.msra.mxu0 0
        %648 = vmatprep.subr.bf16.mxu0 0
        %649 = vmatpush2.bf16.xpose.msra.mxu0 0
        %650 = vmatprep.mubr.bf16.mxu0 0
        %651 = vmatmul.mubr.bf16.gmra.mxu0 %v613
        %v652 = vpop.f32.mrf.mxu0
        %v653 = vadd.f32 %v607, %v652
        %v654 = vpop.f32.mrf.mxu0
        %v655 = vpop.f32.mrf.mxu0
        %v656 = vpop.f32.mrf.mxu0
        %657 = vdwg.mxu0
        %v658 = vadd.f32 %v653, %v604
        %v659 = vsel %vm611, %v658, -inf
        %660 = vmax.xlane.f32.xlu0 %v659
        %v661 = vpop.xlane.xlu0 %660
        %v662 = vsub.f32 %v658, %v661
        %v663 = vmul.f32 %v662, 1.442695
        %v664 = vpow.pop %v663
        %v665 = vsel %vm611, %v664, 0.0
        %666 = vadd.xlane.f32.xlu0 %v665
        %v667 = vpop.xlane.xlu0 %666
        %v668 = vpack.c.bf16 %v664, %v664
        %669 = vrot.lane.b32.xlu0 %v599, 64
        %v670 = vpop.permute.xlu0 %669
        %v672 = vsel %vm611, %v668, 0
        %vm674 = vcmask 1043456
        %v676 = vsel %vm674, %v670, 0
        %678 = vmatprep.subr.bf16.mxu0 0
        %679 = vmatpush1.bf16.msra.mxu0 0
        %680 = vmatprep.subr.bf16.mxu0 0
        %681 = vmatpush1.bf16.msra.mxu0 0
        %682 = vmatprep.subr.bf16.mxu0 0
        %683 = vmatpush1.bf16.msra.mxu0 0
        %684 = vmatprep.subr.bf16.mxu0 0
        %685 = vmatpush1.bf16.msra.mxu0 0
        %686 = vmatprep.subr.bf16.mxu0 0
        %687 = vmatpush1.bf16.msra.mxu0 0
        %688 = vmatprep.subr.bf16.mxu0 0
        %689 = vmatpush1.bf16.msra.mxu0 0
        %690 = vmatprep.subr.bf16.mxu0 0
        %691 = vmatpush1.bf16.msra.mxu0 0
        %692 = vmatprep.subr.bf16.mxu0 0
        %693 = vmatpush1.bf16.msra.mxu0 %v676
        %694 = vmatprep.subr.bf16.mxu0 0
        %695 = vmatpush2.bf16.msra.mxu0 0
        %696 = vmatprep.subr.bf16.mxu0 0
        %697 = vmatpush2.bf16.msra.mxu0 0
        %698 = vmatprep.subr.bf16.mxu0 0
        %699 = vmatpush2.bf16.msra.mxu0 0
        %700 = vmatprep.subr.bf16.mxu0 0
        %701 = vmatpush2.bf16.msra.mxu0 0
        %702 = vmatprep.subr.bf16.mxu0 0
        %703 = vmatpush2.bf16.msra.mxu0 0
        %704 = vmatprep.subr.bf16.mxu0 0
        %705 = vmatpush2.bf16.msra.mxu0 0
        %706 = vmatprep.subr.bf16.mxu0 0
        %707 = vmatpush2.bf16.msra.mxu0 0
        %708 = vmatprep.subr.bf16.mxu0 0
        %709 = vmatpush2.bf16.msra.mxu0 0
        %710 = vmatprep.mubr.bf16.mxu0 0
        %711 = vmatmul.mubr.bf16.gmra.mxu0 %v672
        %v712 = vpop.f32.mrf.mxu0
        %v713 = vadd.f32 0.0, %v712
        %v714 = vpop.f32.mrf.mxu0
        %v715 = vpop.f32.mrf.mxu0
        %v716 = vpop.f32.mrf.mxu0
        %717 = vdwg.mxu0
        %v718 = vrcp.pop %v667
        %v719 = vmul.f32 %v713, %v718
        %v720 = vpack.c.bf16 %v719, %v719
        %vm721 = vcmask 60416
        %722 = vst.msk [vmem:[#allocation9] sm:$0xf] %vm721, %v720
        %s723 = scalar_lea.vmem [#allocation2], 4
        %v724 = vld [vmem:[%s723] sm:$0xf]
        %v725 = vunpack.c.l.bf16 %v724
        %726 = vrot.lane.b32.xlu0 %v599, 120
        %v727 = vpop.permute.xlu0 %726
        %728 = vrot.lane.b32.xlu0 %v599, 88
        %v729 = vpop.permute.xlu0 %728
        %v731 = vsel %vm611, %v727, 0
        %v734 = vsel %vm611, %v729, 0
        %736 = vmatprep.subr.bf16.mxu0 0
        %737 = vmatpush1.bf16.xpose.msra.mxu0 0
        %738 = vmatprep.subr.bf16.mxu0 0
        %739 = vmatpush1.bf16.xpose.msra.mxu0 0
        %740 = vmatprep.subr.bf16.mxu0 0
        %741 = vmatpush1.bf16.xpose.msra.mxu0 0
        %742 = vmatprep.subr.bf16.mxu0 0
        %743 = vmatpush1.bf16.xpose.msra.mxu0 0
        %744 = vmatprep.subr.bf16.mxu0 0
        %745 = vmatpush1.bf16.xpose.msra.mxu0 0
        %746 = vmatprep.subr.bf16.mxu0 0
        %747 = vmatpush1.bf16.xpose.msra.mxu0 0
        %748 = vmatprep.subr.bf16.mxu0 0
        %749 = vmatpush1.bf16.xpose.msra.mxu0 0
        %750 = vmatprep.subr.bf16.mxu0 0
        %751 = vmatpush1.bf16.xpose.msra.mxu0 %v734
        %752 = vmatprep.subr.bf16.mxu0 0
        %753 = vmatpush2.bf16.xpose.msra.mxu0 0
        %754 = vmatprep.subr.bf16.mxu0 0
        %755 = vmatpush2.bf16.xpose.msra.mxu0 0
        %756 = vmatprep.subr.bf16.mxu0 0
        %757 = vmatpush2.bf16.xpose.msra.mxu0 0
        %758 = vmatprep.subr.bf16.mxu0 0
        %759 = vmatpush2.bf16.xpose.msra.mxu0 0
        %760 = vmatprep.subr.bf16.mxu0 0
        %761 = vmatpush2.bf16.xpose.msra.mxu0 0
        %762 = vmatprep.subr.bf16.mxu0 0
        %763 = vmatpush2.bf16.xpose.msra.mxu0 0
        %764 = vmatprep.subr.bf16.mxu0 0
        %765 = vmatpush2.bf16.xpose.msra.mxu0 0
        %766 = vmatprep.subr.bf16.mxu0 0
        %767 = vmatpush2.bf16.xpose.msra.mxu0 0
        %768 = vmatprep.mubr.bf16.mxu0 0
        %769 = vmatmul.mubr.bf16.gmra.mxu0 %v731
        %v770 = vpop.f32.mrf.mxu0
        %v771 = vadd.f32 %v725, %v770
        %v772 = vpop.f32.mrf.mxu0
        %v773 = vpop.f32.mrf.mxu0
        %v774 = vpop.f32.mrf.mxu0
        %775 = vdwg.mxu0
        %v776 = vadd.f32 %v771, %v604
        %v777 = vsel %vm611, %v776, -inf
        %778 = vmax.xlane.f32.xlu0 %v777
        %v779 = vpop.xlane.xlu0 %778
        %v780 = vsub.f32 %v776, %v779
        %v781 = vmul.f32 %v780, 1.442695
        %v782 = vpow.pop %v781
        %v783 = vsel %vm611, %v782, 0.0
        %784 = vadd.xlane.f32.xlu0 %v783
        %v785 = vpop.xlane.xlu0 %784
        %v786 = vpack.c.bf16 %v782, %v782
        %787 = vrot.lane.b32.xlu0 %v599, 56
        %v788 = vpop.permute.xlu0 %787
        %v790 = vsel %vm611, %v786, 0
        %v793 = vsel %vm674, %v788, 0
        %795 = vmatprep.subr.bf16.mxu0 0
        %796 = vmatpush1.bf16.msra.mxu0 0
        %797 = vmatprep.subr.bf16.mxu0 0
        %798 = vmatpush1.bf16.msra.mxu0 0
        %799 = vmatprep.subr.bf16.mxu0 0
        %800 = vmatpush1.bf16.msra.mxu0 0
        %801 = vmatprep.subr.bf16.mxu0 0
        %802 = vmatpush1.bf16.msra.mxu0 0
        %803 = vmatprep.subr.bf16.mxu0 0
        %804 = vmatpush1.bf16.msra.mxu0 0
        %805 = vmatprep.subr.bf16.mxu0 0
        %806 = vmatpush1.bf16.msra.mxu0 0
        %807 = vmatprep.subr.bf16.mxu0 0
        %808 = vmatpush1.bf16.msra.mxu0 0
        %809 = vmatprep.subr.bf16.mxu0 0
        %810 = vmatpush1.bf16.msra.mxu0 %v793
        %811 = vmatprep.subr.bf16.mxu0 0
        %812 = vmatpush2.bf16.msra.mxu0 0
        %813 = vmatprep.subr.bf16.mxu0 0
        %814 = vmatpush2.bf16.msra.mxu0 0
        %815 = vmatprep.subr.bf16.mxu0 0
        %816 = vmatpush2.bf16.msra.mxu0 0
        %817 = vmatprep.subr.bf16.mxu0 0
        %818 = vmatpush2.bf16.msra.mxu0 0
        %819 = vmatprep.subr.bf16.mxu0 0
        %820 = vmatpush2.bf16.msra.mxu0 0
        %821 = vmatprep.subr.bf16.mxu0 0
        %822 = vmatpush2.bf16.msra.mxu0 0
        %823 = vmatprep.subr.bf16.mxu0 0
        %824 = vmatpush2.bf16.msra.mxu0 0
        %825 = vmatprep.subr.bf16.mxu0 0
        %826 = vmatpush2.bf16.msra.mxu0 0
        %827 = vmatprep.mubr.bf16.mxu0 0
        %828 = vmatmul.mubr.bf16.gmra.mxu0 %v790
        %v829 = vpop.f32.mrf.mxu0
        %v830 = vadd.f32 0.0, %v829
        %v831 = vpop.f32.mrf.mxu0
        %v832 = vpop.f32.mrf.mxu0
        %v833 = vpop.f32.mrf.mxu0
        %834 = vdwg.mxu0
        %v835 = vrcp.pop %v785
        %v836 = vmul.f32 %v830, %v835
        %v837 = vpack.c.bf16 %v836, %v836
        %v839 = vunpack.c.l.b16 %v837
        %v840 = vpack.c.b16 %v839, %v839
        %841 = vrot.lane.b32.xlu0 %v840, 8
        %v842 = vpop.permute.xlu0 %841
        %vm844 = vcmask 126016
        %845 = vst.msk [vmem:[#allocation9] sm:$0xf] %vm844, %v842
        %s846 = scalar_lea.vmem [#allocation2], 8
        %v847 = vld [vmem:[%s846] sm:$0xf]
        %v848 = vunpack.c.l.bf16 %v847
        %849 = vrot.lane.b32.xlu0 %v599, 112
        %v850 = vpop.permute.xlu0 %849
        %851 = vrot.lane.b32.xlu0 %v599, 80
        %v852 = vpop.permute.xlu0 %851
        %v854 = vsel %vm611, %v850, 0
        %v857 = vsel %vm611, %v852, 0
        %859 = vmatprep.subr.bf16.mxu0 0
        %860 = vmatpush1.bf16.xpose.msra.mxu0 0
        %861 = vmatprep.subr.bf16.mxu0 0
        %862 = vmatpush1.bf16.xpose.msra.mxu0 0
        %863 = vmatprep.subr.bf16.mxu0 0
        %864 = vmatpush1.bf16.xpose.msra.mxu0 0
        %865 = vmatprep.subr.bf16.mxu0 0
        %866 = vmatpush1.bf16.xpose.msra.mxu0 0
        %867 = vmatprep.subr.bf16.mxu0 0
        %868 = vmatpush1.bf16.xpose.msra.mxu0 0
        %869 = vmatprep.subr.bf16.mxu0 0
        %870 = vmatpush1.bf16.xpose.msra.mxu0 0
        %871 = vmatprep.subr.bf16.mxu0 0
        %872 = vmatpush1.bf16.xpose.msra.mxu0 0
        %873 = vmatprep.subr.bf16.mxu0 0
        %874 = vmatpush1.bf16.xpose.msra.mxu0 %v857
        %875 = vmatprep.subr.bf16.mxu0 0
        %876 = vmatpush2.bf16.xpose.msra.mxu0 0
        %877 = vmatprep.subr.bf16.mxu0 0
        %878 = vmatpush2.bf16.xpose.msra.mxu0 0
        %879 = vmatprep.subr.bf16.mxu0 0
        %880 = vmatpush2.bf16.xpose.msra.mxu0 0
        %881 = vmatprep.subr.bf16.mxu0 0
        %882 = vmatpush2.bf16.xpose.msra.mxu0 0
        %883 = vmatprep.subr.bf16.mxu0 0
        %884 = vmatpush2.bf16.xpose.msra.mxu0 0
        %885 = vmatprep.subr.bf16.mxu0 0
        %886 = vmatpush2.bf16.xpose.msra.mxu0 0
        %887 = vmatprep.subr.bf16.mxu0 0
        %888 = vmatpush2.bf16.xpose.msra.mxu0 0
        %889 = vmatprep.subr.bf16.mxu0 0
        %890 = vmatpush2.bf16.xpose.msra.mxu0 0
        %891 = vmatprep.mubr.bf16.mxu0 0
        %892 = vmatmul.mubr.bf16.gmra.mxu0 %v854
        %v893 = vpop.f32.mrf.mxu0
        %v894 = vadd.f32 %v848, %v893
        %v895 = vpop.f32.mrf.mxu0
        %v896 = vpop.f32.mrf.mxu0
        %v897 = vpop.f32.mrf.mxu0
        %898 = vdwg.mxu0
        %v899 = vadd.f32 %v894, %v604
        %v900 = vsel %vm611, %v899, -inf
        %901 = vmax.xlane.f32.xlu0 %v900
        %v902 = vpop.xlane.xlu0 %901
        %v903 = vsub.f32 %v899, %v902
        %v904 = vmul.f32 %v903, 1.442695
        %v905 = vpow.pop %v904
        %v906 = vsel %vm611, %v905, 0.0
        %907 = vadd.xlane.f32.xlu0 %v906
        %v908 = vpop.xlane.xlu0 %907
        %v909 = vpack.c.bf16 %v905, %v905
        %910 = vrot.lane.b32.xlu0 %v599, 48
        %v911 = vpop.permute.xlu0 %910
        %v913 = vsel %vm611, %v909, 0
        %v916 = vsel %vm674, %v911, 0
        %918 = vmatprep.subr.bf16.mxu0 0
        %919 = vmatpush1.bf16.msra.mxu0 0
        %920 = vmatprep.subr.bf16.mxu0 0
        %921 = vmatpush1.bf16.msra.mxu0 0
        %922 = vmatprep.subr.bf16.mxu0 0
        %923 = vmatpush1.bf16.msra.mxu0 0
        %924 = vmatprep.subr.bf16.mxu0 0
        %925 = vmatpush1.bf16.msra.mxu0 0
        %926 = vmatprep.subr.bf16.mxu0 0
        %927 = vmatpush1.bf16.msra.mxu0 0
        %928 = vmatprep.subr.bf16.mxu0 0
        %929 = vmatpush1.bf16.msra.mxu0 0
        %930 = vmatprep.subr.bf16.mxu0 0
        %931 = vmatpush1.bf16.msra.mxu0 0
        %932 = vmatprep.subr.bf16.mxu0 0
        %933 = vmatpush1.bf16.msra.mxu0 %v916
        %934 = vmatprep.subr.bf16.mxu0 0
        %935 = vmatpush2.bf16.msra.mxu0 0
        %936 = vmatprep.subr.bf16.mxu0 0
        %937 = vmatpush2.bf16.msra.mxu0 0
        %938 = vmatprep.subr.bf16.mxu0 0
        %939 = vmatpush2.bf16.msra.mxu0 0
        %940 = vmatprep.subr.bf16.mxu0 0
        %941 = vmatpush2.bf16.msra.mxu0 0
        %942 = vmatprep.subr.bf16.mxu0 0
        %943 = vmatpush2.bf16.msra.mxu0 0
        %944 = vmatprep.subr.bf16.mxu0 0
        %945 = vmatpush2.bf16.msra.mxu0 0
        %946 = vmatprep.subr.bf16.mxu0 0
        %947 = vmatpush2.bf16.msra.mxu0 0
        %948 = vmatprep.subr.bf16.mxu0 0
        %949 = vmatpush2.bf16.msra.mxu0 0
        %950 = vmatprep.mubr.bf16.mxu0 0
        %951 = vmatmul.mubr.bf16.gmra.mxu0 %v913
        %v952 = vpop.f32.mrf.mxu0
        %v953 = vadd.f32 0.0, %v952
        %v954 = vpop.f32.mrf.mxu0
        %v955 = vpop.f32.mrf.mxu0
        %v956 = vpop.f32.mrf.mxu0
        %957 = vdwg.mxu0
        %v958 = vrcp.pop %v908
        %v959 = vmul.f32 %v953, %v958
        %v960 = vpack.c.bf16 %v959, %v959
        %v962 = vunpack.c.l.b16 %v960
        %v963 = vpack.c.b16 %v962, %v962
        %964 = vrot.lane.b32.xlu0 %v963, 16
        %v965 = vpop.permute.xlu0 %964
        %vm967 = vcmask 191616
        %968 = vst.msk [vmem:[#allocation9] sm:$0xf] %vm967, %v965
        %s969 = scalar_lea.vmem [#allocation2], 12
        %v970 = vld [vmem:[%s969] sm:$0xf]
        %v971 = vunpack.c.l.bf16 %v970
        %972 = vrot.lane.b32.xlu0 %v599, 104
        %v973 = vpop.permute.xlu0 %972
        %974 = vrot.lane.b32.xlu0 %v599, 72
        %v975 = vpop.permute.xlu0 %974
        %v977 = vsel %vm611, %v973, 0
        %v980 = vsel %vm611, %v975, 0
        %982 = vmatprep.subr.bf16.mxu0 0
        %983 = vmatpush1.bf16.xpose.msra.mxu0 0
        %984 = vmatprep.subr.bf16.mxu0 0
        %985 = vmatpush1.bf16.xpose.msra.mxu0 0
        %986 = vmatprep.subr.bf16.mxu0 0
        %987 = vmatpush1.bf16.xpose.msra.mxu0 0
        %988 = vmatprep.subr.bf16.mxu0 0
        %989 = vmatpush1.bf16.xpose.msra.mxu0 0
        %990 = vmatprep.subr.bf16.mxu0 0
        %991 = vmatpush1.bf16.xpose.msra.mxu0 0
        %992 = vmatprep.subr.bf16.mxu0 0
        %993 = vmatpush1.bf16.xpose.msra.mxu0 0
        %994 = vmatprep.subr.bf16.mxu0 0
        %995 = vmatpush1.bf16.xpose.msra.mxu0 0
        %996 = vmatprep.subr.bf16.mxu0 0
        %997 = vmatpush1.bf16.xpose.msra.mxu0 %v980
        %998 = vmatprep.subr.bf16.mxu0 0
        %999 = vmatpush2.bf16.xpose.msra.mxu0 0
        %1000 = vmatprep.subr.bf16.mxu0 0
        %1001 = vmatpush2.bf16.xpose.msra.mxu0 0
        %1002 = vmatprep.subr.bf16.mxu0 0
        %1003 = vmatpush2.bf16.xpose.msra.mxu0 0
        %1004 = vmatprep.subr.bf16.mxu0 0
        %1005 = vmatpush2.bf16.xpose.msra.mxu0 0
        %1006 = vmatprep.subr.bf16.mxu0 0
        %1007 = vmatpush2.bf16.xpose.msra.mxu0 0
        %1008 = vmatprep.subr.bf16.mxu0 0
        %1009 = vmatpush2.bf16.xpose.msra.mxu0 0
        %1010 = vmatprep.subr.bf16.mxu0 0
        %1011 = vmatpush2.bf16.xpose.msra.mxu0 0
        %1012 = vmatprep.subr.bf16.mxu0 0
        %1013 = vmatpush2.bf16.xpose.msra.mxu0 0
        %1014 = vmatprep.mubr.bf16.mxu0 0
        %1015 = vmatmul.mubr.bf16.gmra.mxu0 %v977
        %v1016 = vpop.f32.mrf.mxu0
        %v1017 = vadd.f32 %v971, %v1016
        %v1018 = vpop.f32.mrf.mxu0
        %v1019 = vpop.f32.mrf.mxu0
        %v1020 = vpop.f32.mrf.mxu0
        %1021 = vdwg.mxu0
        %v1022 = vadd.f32 %v1017, %v604
        %v1023 = vsel %vm611, %v1022, -inf
        %1024 = vmax.xlane.f32.xlu0 %v1023
        %v1025 = vpop.xlane.xlu0 %1024
        %v1026 = vsub.f32 %v1022, %v1025
        %v1027 = vmul.f32 %v1026, 1.442695
        %v1028 = vpow.pop %v1027
        %v1029 = vsel %vm611, %v1028, 0.0
        %1030 = vadd.xlane.f32.xlu0 %v1029
        %v1031 = vpop.xlane.xlu0 %1030
        %v1032 = vpack.c.bf16 %v1028, %v1028
        %1033 = vrot.lane.b32.xlu0 %v599, 40
        %v1034 = vpop.permute.xlu0 %1033
        %v1036 = vsel %vm611, %v1032, 0
        %v1039 = vsel %vm674, %v1034, 0
        %1041 = vmatprep.subr.bf16.mxu0 0
        %1042 = vmatpush1.bf16.msra.mxu0 0
        %1043 = vmatprep.subr.bf16.mxu0 0
        %1044 = vmatpush1.bf16.msra.mxu0 0
        %1045 = vmatprep.subr.bf16.mxu0 0
        %1046 = vmatpush1.bf16.msra.mxu0 0
        %1047 = vmatprep.subr.bf16.mxu0 0
        %1048 = vmatpush1.bf16.msra.mxu0 0
        %1049 = vmatprep.subr.bf16.mxu0 0
        %1050 = vmatpush1.bf16.msra.mxu0 0
        %1051 = vmatprep.subr.bf16.mxu0 0
        %1052 = vmatpush1.bf16.msra.mxu0 0
        %1053 = vmatprep.subr.bf16.mxu0 0
        %1054 = vmatpush1.bf16.msra.mxu0 0
        %1055 = vmatprep.subr.bf16.mxu0 0
        %1056 = vmatpush1.bf16.msra.mxu0 %v1039
        %1057 = vmatprep.subr.bf16.mxu0 0
        %1058 = vmatpush2.bf16.msra.mxu0 0
        %1059 = vmatprep.subr.bf16.mxu0 0
        %1060 = vmatpush2.bf16.msra.mxu0 0
        %1061 = vmatprep.subr.bf16.mxu0 0
        %1062 = vmatpush2.bf16.msra.mxu0 0
        %1063 = vmatprep.subr.bf16.mxu0 0
        %1064 = vmatpush2.bf16.msra.mxu0 0
        %1065 = vmatprep.subr.bf16.mxu0 0
        %1066 = vmatpush2.bf16.msra.mxu0 0
        %1067 = vmatprep.subr.bf16.mxu0 0
        %1068 = vmatpush2.bf16.msra.mxu0 0
        %1069 = vmatprep.subr.bf16.mxu0 0
        %1070 = vmatpush2.bf16.msra.mxu0 0
        %1071 = vmatprep.subr.bf16.mxu0 0
        %1072 = vmatpush2.bf16.msra.mxu0 0
        %1073 = vmatprep.mubr.bf16.mxu0 0
        %1074 = vmatmul.mubr.bf16.gmra.mxu0 %v1036
        %v1075 = vpop.f32.mrf.mxu0
        %v1076 = vadd.f32 0.0, %v1075
        %v1077 = vpop.f32.mrf.mxu0
        %v1078 = vpop.f32.mrf.mxu0
        %v1079 = vpop.f32.mrf.mxu0
        %1080 = vdwg.mxu0
        %v1081 = vrcp.pop %v1031
        %v1082 = vmul.f32 %v1076, %v1081
        %v1083 = vpack.c.bf16 %v1082, %v1082
        %v1085 = vunpack.c.l.b16 %v1083
        %v1086 = vpack.c.b16 %v1085, %v1085
        %1087 = vrot.lane.b32.xlu0 %v1086, 24
        %v1088 = vpop.permute.xlu0 %1087
        %vm1090 = vcmask 257216
        %1091 = vst.msk [vmem:[#allocation9] sm:$0xf] %vm1090, %v1088
        %v1092 = vld [vmem:[#allocation9] sm:$0xf]
        %v1093 = vld [vmem:[#allocation5] sm:$0xf]
        %v1094 = vld [vmem:[#allocation5 + $0x4] sm:$0xf]
        %v1095 = vld [vmem:[#allocation5 + $0x8] sm:$0xf]
        %v1096 = vld [vmem:[#allocation5 + $0xc] sm:$0xf]
        %v1101 = vunpack.c.l.b16 %v1093
        %v1102 = vunpack.c.l.b16 %v1094
        %v1103 = vunpack.c.l.b16 %v1095
        %v1104 = vunpack.c.l.b16 %v1096
        %v1105 = vpack.c.b16 %v1102, %v1101
        %v1106 = vpack.c.b16 %v1104, %v1103
        %v1110 = vsel %vm522, %v1092, 0
        %1112 = vmatprep.subr.bf16.mxu0 0
        %1113 = vmatpush1.bf16.msra.mxu0 0
        %1114 = vmatprep.subr.bf16.mxu0 0
        %1115 = vmatpush1.bf16.msra.mxu0 0
        %1116 = vmatprep.subr.bf16.mxu0 0
        %1117 = vmatpush1.bf16.msra.mxu0 0
        %1118 = vmatprep.subr.bf16.mxu0 0
        %1119 = vmatpush1.bf16.msra.mxu0 0
        %1120 = vmatprep.subr.bf16.mxu0 0
        %1121 = vmatpush1.bf16.msra.mxu0 0
        %1122 = vmatprep.subr.bf16.mxu0 0
        %1123 = vmatpush1.bf16.msra.mxu0 0
        %1124 = vmatprep.subr.bf16.mxu0 0
        %1125 = vmatpush1.bf16.msra.mxu0 %v1106
        %1126 = vmatprep.subr.bf16.mxu0 0
        %1127 = vmatpush1.bf16.msra.mxu0 %v1105
        %1128 = vmatprep.subr.bf16.mxu0 0
        %1129 = vmatpush2.bf16.msra.mxu0 0
        %1130 = vmatprep.subr.bf16.mxu0 0
        %1131 = vmatpush2.bf16.msra.mxu0 0
        %1132 = vmatprep.subr.bf16.mxu0 0
        %1133 = vmatpush2.bf16.msra.mxu0 0
        %1134 = vmatprep.subr.bf16.mxu0 0
        %1135 = vmatpush2.bf16.msra.mxu0 0
        %1136 = vmatprep.subr.bf16.mxu0 0
        %1137 = vmatpush2.bf16.msra.mxu0 0
        %1138 = vmatprep.subr.bf16.mxu0 0
        %1139 = vmatpush2.bf16.msra.mxu0 0
        %1140 = vmatprep.subr.bf16.mxu0 0
        %1141 = vmatpush2.bf16.msra.mxu0 0
        %1142 = vmatprep.subr.bf16.mxu0 0
        %1143 = vmatpush2.bf16.msra.mxu0 0
        %1144 = vmatprep.mubr.bf16.mxu0 0
        %1145 = vmatmul.mubr.bf16.gmra.mxu0 %v1110
        %v1146 = vpop.f32.mrf.mxu0
        %v1147 = vadd.f32 0.0, %v1146
        %v1148 = vpop.f32.mrf.mxu0
        %v1149 = vpop.f32.mrf.mxu0
        %v1150 = vpop.f32.mrf.mxu0
        %1151 = vdwg.mxu0
        %v1152 = vadd.f32 %v519, %v1147
        %v1153 = vmul.f32 %v1152, %v1152
        %v1154 = vsel %vm522, %v1153, 0.0
        %1155 = vadd.xlane.f32.xlu0 %v1154
        %v1156 = vpop.xlane.xlu0 %1155
        %v1157 = vmul.f32 %v1156, %v526
        %v1158 = vadd.f32 %v1157, 1e-06
        %v1159 = vrsqrt.pop %v1158
        %v1160 = vmul.f32 %v1152, %v1159
        %v1161 = vld [vmem:[#allocation6] sm:$0x1]
        %v1163 = vlaneseq
        %v1164 = vshrl.u32 %v1163, 7
        %v1165 = vsub.s32 0, %v1164
        %v1166 = vrot.slane %v1161, %v1165
        %v1168 = vmul.f32 %v1160, %v1166
        %v1169 = vpack.c.bf16 %v1168, %v1168
        %v1170 = vld [vmem:[#allocation7] sm:$0xf]
        %v1171 = vld [vmem:[#allocation7 + $0x4] sm:$0xf]
        %v1172 = vld [vmem:[#allocation7 + $0x8] sm:$0xf]
        %v1173 = vld [vmem:[#allocation7 + $0xc] sm:$0xf]
        %v1178 = vunpack.c.l.b16 %v1170
        %v1179 = vunpack.c.l.b16 %v1171
        %v1180 = vunpack.c.l.b16 %v1172
        %v1181 = vunpack.c.l.b16 %v1173
        %v1182 = vpack.c.b16 %v1179, %v1178
        %v1183 = vpack.c.b16 %v1181, %v1180
        %v1187 = vsel %vm522, %v1169, 0
        %1189 = vmatprep.subr.bf16.mxu0 0
        %1190 = vmatpush1.bf16.msra.mxu0 0
        %1191 = vmatprep.subr.bf16.mxu0 0
        %1192 = vmatpush1.bf16.msra.mxu0 0
        %1193 = vmatprep.subr.bf16.mxu0 0
        %1194 = vmatpush1.bf16.msra.mxu0 0
        %1195 = vmatprep.subr.bf16.mxu0 0
        %1196 = vmatpush1.bf16.msra.mxu0 0
        %1197 = vmatprep.subr.bf16.mxu0 0
        %1198 = vmatpush1.bf16.msra.mxu0 0
        %1199 = vmatprep.subr.bf16.mxu0 0
        %1200 = vmatpush1.bf16.msra.mxu0 0
        %1201 = vmatprep.subr.bf16.mxu0 0
        %1202 = vmatpush1.bf16.msra.mxu0 %v1183
        %1203 = vmatprep.subr.bf16.mxu0 0
        %1204 = vmatpush1.bf16.msra.mxu0 %v1182
        %1205 = vmatprep.subr.bf16.mxu0 0
        %1206 = vmatpush2.bf16.msra.mxu0 0
        %1207 = vmatprep.subr.bf16.mxu0 0
        %1208 = vmatpush2.bf16.msra.mxu0 0
        %1209 = vmatprep.subr.bf16.mxu0 0
        %1210 = vmatpush2.bf16.msra.mxu0 0
        %1211 = vmatprep.subr.bf16.mxu0 0
        %1212 = vmatpush2.bf16.msra.mxu0 0
        %1213 = vmatprep.subr.bf16.mxu0 0
        %1214 = vmatpush2.bf16.msra.mxu0 0
        %1215 = vmatprep.subr.bf16.mxu0 0
        %1216 = vmatpush2.bf16.msra.mxu0 0
        %1217 = vmatprep.subr.bf16.mxu0 0
        %1218 = vmatpush2.bf16.msra.mxu0 0
        %1219 = vmatprep.subr.bf16.mxu0 0
        %1220 = vmatpush2.bf16.msra.mxu0 0
        %1221 = vmatprep.mubr.bf16.mxu0 0
        %1222 = vmatmul.mubr.bf16.gmra.mxu0 %v1187
        %v1223 = vpop.f32.mrf.mxu0
        %v1224 = vadd.f32 0.0, %v1223
        %v1225 = vpop.f32.mrf.mxu0
        %v1226 = vpop.f32.mrf.mxu0
        %v1227 = vpop.f32.mrf.mxu0
        %1228 = vdwg.mxu0
        %v1229 = vmax.f32 %v1224, 0.0
        %v1230 = vpack.c.bf16 %v1229, %v1229
        %v1231 = vld [vmem:[#allocation8] sm:$0xf]
        %v1232 = vld [vmem:[#allocation8 + $0x4] sm:$0xf]
        %v1233 = vld [vmem:[#allocation8 + $0x8] sm:$0xf]
        %v1234 = vld [vmem:[#allocation8 + $0xc] sm:$0xf]
        %v1235 = vld [vmem:[#allocation8 + $0x10] sm:$0xf]
        %v1236 = vld [vmem:[#allocation8 + $0x14] sm:$0xf]
        %v1237 = vld [vmem:[#allocation8 + $0x18] sm:$0xf]
        %v1238 = vld [vmem:[#allocation8 + $0x1c] sm:$0xf]
        %v1247 = vunpack.c.l.b16 %v1231
        %v1248 = vunpack.c.l.b16 %v1232
        %v1249 = vunpack.c.l.b16 %v1233
        %v1250 = vunpack.c.l.b16 %v1234
        %v1251 = vunpack.c.l.b16 %v1235
        %v1252 = vunpack.c.l.b16 %v1236
        %v1253 = vunpack.c.l.b16 %v1237
        %v1254 = vunpack.c.l.b16 %v1238
        %v1255 = vpack.c.b16 %v1248, %v1247
        %v1256 = vpack.c.b16 %v1250, %v1249
        %v1257 = vpack.c.b16 %v1252, %v1251
        %v1258 = vpack.c.b16 %v1254, %v1253
        %vm1263 = vcmask 523264
        %v1265 = vsel %vm1263, %v1230, 0
        %1267 = vmatprep.subr.bf16.mxu0 0
        %1268 = vmatpush1.bf16.msra.mxu0 0
        %1269 = vmatprep.subr.bf16.mxu0 0
        %1270 = vmatpush1.bf16.msra.mxu0 0
        %1271 = vmatprep.subr.bf16.mxu0 0
        %1272 = vmatpush1.bf16.msra.mxu0 0
        %1273 = vmatprep.subr.bf16.mxu0 0
        %1274 = vmatpush1.bf16.msra.mxu0 0
        %1275 = vmatprep.subr.bf16.mxu0 0
        %1276 = vmatpush1.bf16.msra.mxu0 %v1258
        %1277 = vmatprep.subr.bf16.mxu0 0
        %1278 = vmatpush1.bf16.msra.mxu0 %v1257
        %1279 = vmatprep.subr.bf16.mxu0 0
        %1280 = vmatpush1.bf16.msra.mxu0 %v1256
        %1281 = vmatprep.subr.bf16.mxu0 0
        %1282 = vmatpush1.bf16.msra.mxu0 %v1255
        %1283 = vmatprep.subr.bf16.mxu0 0
        %1284 = vmatpush2.bf16.msra.mxu0 0
        %1285 = vmatprep.subr.bf16.mxu0 0
        %1286 = vmatpush2.bf16.msra.mxu0 0
        %1287 = vmatprep.subr.bf16.mxu0 0
        %1288 = vmatpush2.bf16.msra.mxu0 0
        %1289 = vmatprep.subr.bf16.mxu0 0
        %1290 = vmatpush2.bf16.msra.mxu0 0
        %1291 = vmatprep.subr.bf16.mxu0 0
        %1292 = vmatpush2.bf16.msra.mxu0 0
        %1293 = vmatprep.subr.bf16.mxu0 0
        %1294 = vmatpush2.bf16.msra.mxu0 0
        %1295 = vmatprep.subr.bf16.mxu0 0
        %1296 = vmatpush2.bf16.msra.mxu0 0
        %1297 = vmatprep.subr.bf16.mxu0 0
        %1298 = vmatpush2.bf16.msra.mxu0 0
        %1299 = vmatprep.mubr.bf16.mxu0 0
        %1300 = vmatmul.mubr.bf16.gmra.mxu0 %v1265
        %v1301 = vpop.f32.mrf.mxu0
        %v1302 = vadd.f32 0.0, %v1301
        %v1303 = vpop.f32.mrf.mxu0
        %v1304 = vpop.f32.mrf.mxu0
        %v1305 = vpop.f32.mrf.mxu0
        %1306 = vdwg.mxu0
        %v1307 = vadd.f32 %v1152, %v1302
        %v1308 = vpack.c.bf16 %v1307, %v1307
        %vm1309 = vcmask 257024
        %1310 = vst.msk [vmem:[%s199] sm:$0xf] %vm1309, %v1308
        %s1311 = sand.u32 %s89, 1
        %s1312 = scalar_lea.sflag [#allocation13], %s1311
        %s1313 = sand.u32 %s89, 1
        %s1314 = smul.addr %s1313, 4
        %s1315 = scalar_lea.vmem [#allocation16], %s1314
        // Predicated region
        $region241: #{tpu_custom_call.1} parent=27 // pred_check
          %p1316 = pneg %p99
        $region242: #{tpu_custom_call.1} parent=27 // pred_check_branch
          %1318 = sbr.rel (%p1316) target = $region244
        $region243: #{tpu_custom_call.1} parent=27 // pred_region
          %s1320 = ssub.s32 64, 64
          %1321 = vsyncadd %s1312, %s1320
          %s1322 = smul.addr %s29, 64
          %s1323 = scalar_lea.hbm %s9, %s1322
          %s1325 = sshll.u32 %s1315, 4
          %s1326 = int_to_ptr.vmem [resolvable:$true] %s1325
          %1328 = dma.vmem_to_hbm [thread:$0]  %s1326, 64, %s1323, %s1312
        $region244: #{tpu_custom_call.1} parent=27 // pred_fallthru
          _
      $region28: #{tpu_custom_call.1} parent=5 // pred_fallthru
        _
      %p1329 = scmp.le.s32.totalorder 2, %s24
      // Predicated region
      $region245: #{tpu_custom_call.1} parent=5 // pred_check
        %p1330 = pneg %p1329
      $region246: #{tpu_custom_call.1} parent=5 // pred_check_branch
        %1332 = sbr.rel (%p1330) target = $region248
      $region247: #{tpu_custom_call.1} parent=5 // pred_region
        %s1333 = ssub.s32 %s24, 2
        // Predicated region
        $region249: #{tpu_custom_call.1} parent=247 // pred_check
          %p1334 = pneg %p105
        $region250: #{tpu_custom_call.1} parent=247 // pred_check_branch
          %1336 = sbr.rel (%p1334) target = $region252
        $region251: #{tpu_custom_call.1} parent=247 // pred_region
          %s1337 = sand.u32 %s90, 1
          %s1338 = scalar_lea.sflag [#allocation13], %s1337
          %s1339 = sand.u32 %s90, 1
          %s1340 = smul.addr %s1339, 4
          %s1341 = scalar_lea.vmem [#allocation16], %s1340
          %1342 = dma.done %s1338, 64
        $region252: #{tpu_custom_call.1} parent=247 // pred_fallthru
          _
      $region248: #{tpu_custom_call.1} parent=5 // pred_fallthru
        _
    $region6: #{tpu_custom_call.1} parent=1 // loop_footer
      %s28 = sadd.s32 1, %s24
    $region7: #{tpu_custom_call.1} parent=1 // loop_footer_branch
      %23 = sbr.rel target = $region3
    $region8: #{tpu_custom_call.1} parent=1 // loop_exit
      _
    %1343 = vsyncpa [#allocation12], 1
    %s1344 = scalar_lea.sflag [#allocation12], 1
    %1345 = vsyncpa %s1344, 1
    %1346 = vsyncpa [#allocation15], 1
    %s1347 = scalar_lea.sflag [#allocation15], 1
    %1348 = vsyncpa %s1347, 1
    %1349 = vsyncpa [#allocation13], 1
    %s1350 = scalar_lea.sflag [#allocation13], 1
    %1351 = vsyncpa %s1350, 1
  %1352 = vsyncmov [#allocation10]
  %s1353 = vpop.sfrf %1352
  %p1354 = scmp.eq.s32.totalorder %s1353, 0
  %p1355 = pneg %p1354
  %1357 = shalt.err (%p1355)
  %s1358 = scalar_lea.sflag [#allocation10], 1
  %1359 = vsyncmov %s1358
  %s1360 = vpop.sfrf %1359
  %p1361 = scmp.eq.s32.totalorder %s1360, 0
  %p1362 = pneg %p1361
  %1364 = shalt.err (%p1362)
  %s1365 = scalar_lea.sflag [#allocation10], 2
  %1366 = vsyncmov %s1365
  %s1367 = vpop.sfrf %1366
  %p1368 = scmp.eq.s32.totalorder %s1367, 0
  %p1369 = pneg %p1368
  %1371 = shalt.err (%p1369)
  %s1372 = scalar_lea.sflag [#allocation10], 3
  %1373 = vsyncmov %s1372
  %s1374 = vpop.sfrf %1373
  %p1375 = scmp.eq.s32.totalorder %s1374, 0
  %p1376 = pneg %p1375
  %1378 = shalt.err (%p1376)
  %s1379 = scalar_lea.sflag [#allocation10], 4
  %1380 = vsyncmov %s1379
  %s1381 = vpop.sfrf %1380
  %p1382 = scmp.eq.s32.totalorder %s1381, 0
  %p1383 = pneg %p1382
  %1385 = shalt.err (%p1383)
  %s1386 = scalar_lea.sflag [#allocation10], 5
  %1387 = vsyncmov %s1386
  %s1388 = vpop.sfrf %1387
  %p1389 = scmp.eq.s32.totalorder %s1388, 0
  %p1390 = pneg %p1389
  %1392 = shalt.err (%p1390)
  %s1393 = scalar_lea.sflag [#allocation10], 6
  %1394 = vsyncmov %s1393
  %s1395 = vpop.sfrf %1394
  %p1396 = scmp.eq.s32.totalorder %s1395, 0
  %p1397 = pneg %p1396
  %1399 = shalt.err (%p1397)

</llo_original>
